<compile_context>
chip_gen: v6e
topology: v6e:2x2x1
jax: 0.10.0
libtpu: 0.0.40
codegen_flags: <defaults>
</compile_context>

<pallas_src>
import jax
import jax.numpy as jnp
from jax.experimental import pallas as pl
from jax.experimental.pallas import tpu as pltpu


def _gelu_tanh(x):
    # TODO(synk): PyTorch nn.GELU default is erf-exact; tanh approximation kept
    # here to guarantee Mosaic lowering of the transcendental.
    c = 0.7978845608028654  # sqrt(2/pi)
    return 0.5 * x * (1.0 + jnp.tanh(c * (x + 0.044715 * x * x * x)))


def two_stage_attention_kernel(
    h_src_ref, h_tgt_ref, gumbel_ref, oh_src_ref, oh_dst_t_ref,
    w_ih_ref, w_hh_ref, bias_ref, head_ref, head_bias_ref, out_ref,
):
    E, H = h_src_ref.shape                       # one batch element per grid step
    H2, H3, H4, H6 = 2 * H, 3 * H, 4 * H, 6 * H

    x_src_f32 = h_src_ref[...]                   # (E, H) f32 — reused for the output
    x_tgt_f32 = h_tgt_ref[...]

    # Stack the two timesteps [t0 = target, t1 = source] on the sublane axis so each
    # layer-1 direction is ONE (2E, H) x (H, 3H) MXU push instead of two.
    x_seq = jnp.concatenate([x_tgt_f32, x_src_f32], axis=0).astype(jnp.bfloat16)  # (2E, H)

    # ---- packed, gate-fused weights (bf16) and biases (f32)
    w1f = w_ih_ref[0:H, :]                       # layer-1 fwd   (H, 3H)
    w1b = w_ih_ref[H:H2, :]                      # layer-1 bwd
    w2f = w_ih_ref[H2:H4, :]                     # layer-2 fwd   (2H, 3H)
    w2b = w_ih_ref[H4:H6, :]                     # layer-2 bwd
    whh_l1f = w_hh_ref[0:H, :]
    whh_l1b = w_hh_ref[H:H2, :]
    whh_l2b = w_hh_ref[H2:H3, :]                 # layer-2 fwd hidden weights are dead

    bih_l1f, bhh_l1f = bias_ref[0:1, :], bias_ref[1:2, :]
    bih_l1b, bhh_l1b = bias_ref[2:3, :], bias_ref[3:4, :]
    bih_l2f, bhh_l2f = bias_ref[4:5, :], bias_ref[5:6, :]
    bih_l2b, bhh_l2b = bias_ref[6:7, :], bias_ref[7:8, :]

    def gru_first(gi, bhh):
        # h_prev == 0: hidden matmul collapses to its bias and h' = (1-z)*n.
        # r|z fused into a single 2H-lane sigmoid pass (gate order r, z, n).
        rz = jax.nn.sigmoid(gi[:, 0:H2] + bhh[:, 0:H2])
        z = rz[:, H:H2]
        n = jnp.tanh(gi[:, H2:H3] + rz[:, 0:H] * bhh[:, H2:H3])
        return (1.0 - z) * n

    def gru_step(gi, h_prev, whh, bhh):
        gh = jnp.dot(h_prev.astype(jnp.bfloat16), whh,
                     preferred_element_type=jnp.float32) + bhh
        rz = jax.nn.sigmoid(gi[:, 0:H2] + gh[:, 0:H2])
        z = rz[:, H:H2]
        n = jnp.tanh(gi[:, H2:H3] + rz[:, 0:H] * gh[:, H2:H3])
        return (1.0 - z) * n + z * h_prev

    # ---- layer-1 bidirectional GRU over the length-2 sequence [x_tgt, x_src]
    g1f = jnp.dot(x_seq, w1f, preferred_element_type=jnp.float32) + bih_l1f   # (2E, 3H)
    g1b = jnp.dot(x_seq, w1b, preferred_element_type=jnp.float32) + bih_l1b

    hf0 = gru_first(g1f[0:E, :], bhh_l1f)
    hf1 = gru_step(g1f[E:2 * E, :], hf0, whh_l1f, bhh_l1f)
    hb1 = gru_first(g1b[E:2 * E, :], bhh_l1b)
    hb0 = gru_step(g1b[0:E, :], hb1, whh_l1b, bhh_l1b)

    # ---- layer-2 bidirectional GRU (inter-layer dropout = identity in eval);
    # only the t=0 output [gf0 ; gb0] is consumed downstream.  Both timesteps of
    # the bwd direction share one (2E, 2H) x (2H, 3H) K=2H push.
    hcat0 = jnp.concatenate([hf0, hb0], axis=1)                       # (E, 2H), t=0
    hcat1 = jnp.concatenate([hf1, hb1], axis=1)                       # t=1
    hcat_seq = jnp.concatenate([hcat0, hcat1], axis=0).astype(jnp.bfloat16)  # (2E, 2H)

    g2b = jnp.dot(hcat_seq, w2b, preferred_element_type=jnp.float32) + bih_l2b   # (2E, 3H)
    g2f0 = jnp.dot(hcat_seq[0:E, :], w2f,
                   preferred_element_type=jnp.float32) + bih_l2f                 # (E, 3H)

    gf0 = gru_first(g2f0, bhh_l2f)
    gb1 = gru_first(g2b[E:2 * E, :], bhh_l2b)
    gb0 = gru_step(g2b[0:E, :], gb1, whh_l2b, bhh_l2b)

    # ---- rnn_connect: Linear(2H -> 1) as VPU multiply + lane reduce, bias folded
    # into the add (no lane reduction for the bias), then GELU.
    w_fwd = head_ref[0:1, :]                                          # (1, H)
    w_bwd = head_ref[1:2, :]
    lin = (jnp.sum(gf0 * w_fwd, axis=1, keepdims=True)
           + jnp.sum(gb0 * w_bwd, axis=1, keepdims=True)
           + head_bias_ref[...])                                      # (E, 1)
    logits = _gelu_tanh(lin)

    # ---- per-source-node segment softmax (soft) and gumbel-softmax (hard):
    # two plain (E, N) passes against the single one-hot (no widened channel trick).
    oh = oh_src_ref[...]                                              # (E, N) f32
    valid = oh > 0.0

    def segment_softmax(lg):                                          # lg: (E, 1)
        masked = jnp.where(valid, lg, -jnp.inf)                       # (E, N)
        seg_max = jnp.max(masked, axis=0, keepdims=True)              # (1, N)
        edge_max = jnp.sum(jnp.where(valid, seg_max, 0.0),
                           axis=1, keepdims=True)                     # (E, 1)
        ex = jnp.exp(lg - edge_max)                                   # (E, 1)
        seg_sum = jnp.sum(oh * ex, axis=0, keepdims=True)             # (1, N)
        edge_sum = jnp.sum(jnp.where(valid, seg_sum, 0.0),
                           axis=1, keepdims=True)                     # (E, 1)
        return ex / edge_sum

    soft_w = segment_softmax(logits)
    hard_w = segment_softmax((logits + gumbel_ref[...]) * 10.0)       # / tau, tau = 0.1

    # TODO(synk): reference also computes h_soft = einsum('bnh,bnh->bn', q(h_src),
    # k(h_tgt)) but never uses the result; dead compute omitted from the kernel.

    # ---- scatter-sum over destination nodes via the one-hot matmul (kept in f32
    # for parity with the PyTorch reference).
    weighted = x_src_f32 * (soft_w * hard_w)                          # (E, H) f32
    out_ref[...] = jnp.dot(oh_dst_t_ref[...], weighted,
                           preferred_element_type=jnp.float32)        # (N, H)


def init_params(key, H):
    """Deterministic synthetic parameters matching the module's shapes."""
    bound = 1.0 / jnp.sqrt(H)
    names_shapes = [
        ('wih0f', (3, H, H)), ('whh0f', (3, H, H)), ('bih0f', (3, 1, H)), ('bhh0f', (3, 1, H)),
        ('wih0b', (3, H, H)), ('whh0b', (3, H, H)), ('bih0b', (3, 1, H)), ('bhh0b', (3, 1, H)),
        ('wih1f', (3, 2 * H, H)), ('whh1f', (3, H, H)), ('bih1f', (3, 1, H)), ('bhh1f', (3, 1, H)),
        ('wih1b', (3, 2 * H, H)), ('whh1b', (3, H, H)), ('bih1b', (3, 1, H)), ('bhh1b', (3, 1, H)),
        ('wc', (2 * H, 1)), ('bc', (1, 1)),
    ]
    keys = jax.random.split(key, len(names_shapes))
    params = {}
    for k, (name, shape) in zip(keys, names_shapes):
        params[name] = jax.random.uniform(k, shape, jnp.float32, -bound, bound)
    return params


def pack_params(params):
    """Static per-model packing (gate fusion). Hoist/cache outside the hot path."""
    p = params

    def gates_cat(w):    # (3, in, H) -> (in, 3H), gate order (r, z, n)
        return jnp.concatenate([w[0], w[1], w[2]], axis=-1)

    def bias_cat(b):     # (3, 1, H) -> (1, 3H)
        return jnp.concatenate([b[0], b[1], b[2]], axis=-1)

    H = p['wih0f'].shape[-1]
    # input-side weights: [layer1 fwd | layer1 bwd | layer2 fwd | layer2 bwd] on rows.
    w_ih = jnp.concatenate(
        [gates_cat(p['wih0f']), gates_cat(p['wih0b']),
         gates_cat(p['wih1f']), gates_cat(p['wih1b'])], axis=0).astype(jnp.bfloat16)  # (6H, 3H)
    # hidden-side weights; layer-2 forward hidden weights are dead (h_prev == 0 only).
    w_hh = jnp.concatenate(
        [gates_cat(p['whh0f']), gates_cat(p['whh0b']),
         gates_cat(p['whh1b'])], axis=0).astype(jnp.bfloat16)                         # (3H, 3H)
    biases = jnp.concatenate(
        [bias_cat(p['bih0f']), bias_cat(p['bhh0f']),
         bias_cat(p['bih0b']), bias_cat(p['bhh0b']),
         bias_cat(p['bih1f']), bias_cat(p['bhh1f']),
         bias_cat(p['bih1b']), bias_cat(p['bhh1b'])], axis=0).astype(jnp.float32)     # (8, 3H)
    wc = p['wc'].reshape(2 * H)
    head = jnp.stack([wc[:H], wc[H:]], axis=0).astype(jnp.float32)                    # (2, H)
    head_bias = p['bc'].reshape(1, 1).astype(jnp.float32)                             # (1, 1)
    return w_ih, w_hh, biases, head, head_bias


def two_stage_attention(h, edge_index, params, gumbel_noise):
    B, N, H = h.shape
    E = edge_index.shape[1]
    dst_idx = edge_index[0]
    src_idx = edge_index[1]

    w_ih, w_hh, biases, head, head_bias = pack_params(params)

    # ---- per-edge gathers (plain JAX glue); batch stays a leading axis -> grid=(B,).
    h_source = jnp.take(h, src_idx, axis=1).astype(jnp.float32)       # (B, E, H)
    h_target = jnp.take(h, dst_idx, axis=1).astype(jnp.float32)
    gumbel = gumbel_noise.reshape(B, E, 1).astype(jnp.float32)

    # Edge<->node one-hots are batch-invariant (edge_index shared across the batch):
    # O(E*N) instead of O(B^2*E*N), fetched once thanks to constant index maps.
    # TODO(synk): for very large E, additionally tile the edge axis inside each batch
    # step using scalar-prefetched segment-sorted edge ids instead of dense one-hots.
    onehot_src = (src_idx[:, None] == jnp.arange(N)[None, :]).astype(jnp.float32)     # (E, N)
    onehot_dst_t = (jnp.arange(N)[:, None] == dst_idx[None, :]).astype(jnp.float32)   # (N, E)

    const2 = lambda b: (0, 0)
    batched3 = lambda b: (b, 0, 0)

    out = pl.pallas_call(
        two_stage_attention_kernel,
        out_shape=jax.ShapeDtypeStruct((B, N, H), jnp.float32),
        grid_spec=pltpu.PrefetchScalarGridSpec(
            num_scalar_prefetch=0,
            grid=(B,),                                    # per-batch steps: streamed /
            in_specs=[                                    # megacore-parallel on v7x
                pl.BlockSpec((None, E, H), batched3),     # h_source (streamed per step)
                pl.BlockSpec((None, E, H), batched3),     # h_target
                pl.BlockSpec((None, E, 1), batched3),     # gumbel noise
                pl.BlockSpec((E, N), const2),             # one-hot src   (fetched once)
                pl.BlockSpec((N, E), const2),             # one-hot dst^T (fetched once)
                pl.BlockSpec((6 * H, 3 * H), const2),     # packed input-side GRU weights
                pl.BlockSpec((3 * H, 3 * H), const2),     # packed hidden-side GRU weights
                pl.BlockSpec((8, 3 * H), const2),         # packed GRU biases
                pl.BlockSpec((2, H), const2),             # rnn_connect weight halves
                pl.BlockSpec((1, 1), const2),             # rnn_connect bias
            ],
            out_specs=pl.BlockSpec((None, N, H), batched3),
        ),
        compiler_params=pltpu.CompilerParams(
            dimension_semantics=("parallel",),            # use both TensorCores on v7x
            vmem_limit_bytes=32 * 1024 * 1024,            # within v7x's 64 MiB physical VMEM
        ),
    )(h_source, h_target, gumbel, onehot_src, onehot_dst_t,
      w_ih, w_hh, biases, head, head_bias)
    return out


if __name__ == "__main__":
    key = jax.random.PRNGKey(0)
    k_h, k_e, k_p, k_g = jax.random.split(key, 4)

    B, N, H, E = 2, 8, 32, 16           # batch, nodes, hidden_nums, edges
    h = jax.random.normal(k_h, (B, N, H), dtype=jnp.float32)
    edge_index = jax.random.randint(k_e, (2, E), 0, N)   # row0 = target, row1 = source
    params = init_params(k_p, H)
    gumbel_noise = jax.random.gumbel(k_g, (B, E), dtype=jnp.float32)

    out = jax.jit(two_stage_attention)(h, edge_index, params, gumbel_noise)
    out = jax.block_until_ready(out)
    assert out.shape == (B, N, H)
    assert bool(jnp.all(jnp.isfinite(out)))
    print("KERNEL_OK")
</pallas_src>

<mosaic_0001>
module attributes {stable_mosaic.version = 11 : i64} {
  func.func @two_stage_attention_kernel(%arg0: i32, %arg1: memref<1x16x32xf32, #tpu.memory_space<vmem>>, %arg2: memref<1x16x32xf32, #tpu.memory_space<vmem>>, %arg3: memref<1x16x1xf32, #tpu.memory_space<vmem>>, %arg4: memref<16x8xf32, #tpu.memory_space<vmem>>, %arg5: memref<8x16xf32, #tpu.memory_space<vmem>>, %arg6: memref<192x96xbf16, #tpu.memory_space<vmem>>, %arg7: memref<96x96xbf16, #tpu.memory_space<vmem>>, %arg8: memref<8x96xf32, #tpu.memory_space<vmem>>, %arg9: memref<2x32xf32, #tpu.memory_space<vmem>>, %arg10: memref<1x1xf32, #tpu.memory_space<vmem>>, %arg11: memref<1x8x32xf32, #tpu.memory_space<vmem>>) attributes {dimension_semantics = [#tpu.dimension_semantics<parallel>], iteration_bounds = array<i64: 2>, scalar_prefetch = 0 : i64, scratch_operands = 0 : i64, tpu.core_type = #tpu.core_type<tc>, window_params = [{transform_indices = @transform_0, window_bounds = array<i64: 1, 16, 32>}, {transform_indices = @transform_1, window_bounds = array<i64: 1, 16, 32>}, {transform_indices = @transform_2, window_bounds = array<i64: 1, 16, 1>}, {pipeline_mode = #tpu.pipeline_mode<synchronous>, transform_indices = @transform_3, window_bounds = array<i64: 16, 8>}, {pipeline_mode = #tpu.pipeline_mode<synchronous>, transform_indices = @transform_4, window_bounds = array<i64: 8, 16>}, {pipeline_mode = #tpu.pipeline_mode<synchronous>, transform_indices = @transform_5, window_bounds = array<i64: 192, 96>}, {pipeline_mode = #tpu.pipeline_mode<synchronous>, transform_indices = @transform_6, window_bounds = array<i64: 96, 96>}, {pipeline_mode = #tpu.pipeline_mode<synchronous>, transform_indices = @transform_7, window_bounds = array<i64: 8, 96>}, {pipeline_mode = #tpu.pipeline_mode<synchronous>, transform_indices = @transform_8, window_bounds = array<i64: 2, 32>}, {pipeline_mode = #tpu.pipeline_mode<synchronous>, transform_indices = @transform_9, window_bounds = array<i64: 1, 1>}, {transform_indices = @transform_10, window_bounds = array<i64: 1, 8, 32>}]} {
    %c0 = arith.constant 0 : index
    %c0_0 = arith.constant 0 : index
    %c0_1 = arith.constant 0 : index
    %0 = vector.load %arg1[%c0, %c0_0, %c0_1] : memref<1x16x32xf32, #tpu.memory_space<vmem>>, vector<1x16x32xf32>
    %1 = vector.shape_cast %0 : vector<1x16x32xf32> to vector<16x32xf32>
    %c0_2 = arith.constant 0 : index
    %c0_3 = arith.constant 0 : index
    %c0_4 = arith.constant 0 : index
    %2 = vector.load %arg2[%c0_2, %c0_3, %c0_4] : memref<1x16x32xf32, #tpu.memory_space<vmem>>, vector<1x16x32xf32>
    %3 = vector.shape_cast %2 : vector<1x16x32xf32> to vector<16x32xf32>
    %4 = tpu.concatenate %3, %1 in 0 : vector<16x32xf32>, vector<16x32xf32> -> vector<32x32xf32>
    %5 = arith.truncf %4 : vector<32x32xf32> to vector<32x32xbf16>
    %c0_5 = arith.constant 0 : index
    %c0_6 = arith.constant 0 : index
    %6 = vector.load %arg6[%c0_5, %c0_6] : memref<192x96xbf16, #tpu.memory_space<vmem>>, vector<32x96xbf16>
    %c32 = arith.constant 32 : index
    %c0_7 = arith.constant 0 : index
    %7 = vector.load %arg6[%c32, %c0_7] : memref<192x96xbf16, #tpu.memory_space<vmem>>, vector<32x96xbf16>
    %c64 = arith.constant 64 : index
    %c0_8 = arith.constant 0 : index
    %8 = vector.load %arg6[%c64, %c0_8] : memref<192x96xbf16, #tpu.memory_space<vmem>>, vector<64x96xbf16>
    %c128 = arith.constant 128 : index
    %c0_9 = arith.constant 0 : index
    %9 = vector.load %arg6[%c128, %c0_9] : memref<192x96xbf16, #tpu.memory_space<vmem>>, vector<64x96xbf16>
    %c0_10 = arith.constant 0 : index
    %c0_11 = arith.constant 0 : index
    %10 = vector.load %arg7[%c0_10, %c0_11] : memref<96x96xbf16, #tpu.memory_space<vmem>>, vector<32x96xbf16>
    %c32_12 = arith.constant 32 : index
    %c0_13 = arith.constant 0 : index
    %11 = vector.load %arg7[%c32_12, %c0_13] : memref<96x96xbf16, #tpu.memory_space<vmem>>, vector<32x96xbf16>
    %c64_14 = arith.constant 64 : index
    %c0_15 = arith.constant 0 : index
    %12 = vector.load %arg7[%c64_14, %c0_15] : memref<96x96xbf16, #tpu.memory_space<vmem>>, vector<32x96xbf16>
    %c0_16 = arith.constant 0 : index
    %c0_17 = arith.constant 0 : index
    %13 = vector.load %arg8[%c0_16, %c0_17] : memref<8x96xf32, #tpu.memory_space<vmem>>, vector<1x96xf32>
    %c1 = arith.constant 1 : index
    %c0_18 = arith.constant 0 : index
    %14 = vector.load %arg8[%c1, %c0_18] : memref<8x96xf32, #tpu.memory_space<vmem>>, vector<1x96xf32>
    %c2 = arith.constant 2 : index
    %c0_19 = arith.constant 0 : index
    %15 = vector.load %arg8[%c2, %c0_19] : memref<8x96xf32, #tpu.memory_space<vmem>>, vector<1x96xf32>
    %c3 = arith.constant 3 : index
    %c0_20 = arith.constant 0 : index
    %16 = vector.load %arg8[%c3, %c0_20] : memref<8x96xf32, #tpu.memory_space<vmem>>, vector<1x96xf32>
    %c4 = arith.constant 4 : index
    %c0_21 = arith.constant 0 : index
    %17 = vector.load %arg8[%c4, %c0_21] : memref<8x96xf32, #tpu.memory_space<vmem>>, vector<1x96xf32>
    %c5 = arith.constant 5 : index
    %c0_22 = arith.constant 0 : index
    %18 = vector.load %arg8[%c5, %c0_22] : memref<8x96xf32, #tpu.memory_space<vmem>>, vector<1x96xf32>
    %c6 = arith.constant 6 : index
    %c0_23 = arith.constant 0 : index
    %19 = vector.load %arg8[%c6, %c0_23] : memref<8x96xf32, #tpu.memory_space<vmem>>, vector<1x96xf32>
    %c7 = arith.constant 7 : index
    %c0_24 = arith.constant 0 : index
    %20 = vector.load %arg8[%c7, %c0_24] : memref<8x96xf32, #tpu.memory_space<vmem>>, vector<1x96xf32>
    %cst = arith.constant dense<0.000000e+00> : vector<32x96xf32>
    %21 = tpu.matmul %5, %6, %cst {dimension_numbers = #tpu.dot_dimension_numbers<[1], [0], [0], [1], [0, 0, 1, 1], [], []>} : vector<32x32xbf16>, vector<32x96xbf16>, vector<32x96xf32> -> vector<32x96xf32>
    %22 = vector.broadcast %13 : vector<1x96xf32> to vector<32x96xf32>
    %23 = arith.addf %21, %22 : vector<32x96xf32>
    %cst_25 = arith.constant dense<0.000000e+00> : vector<32x96xf32>
    %24 = tpu.matmul %5, %7, %cst_25 {dimension_numbers = #tpu.dot_dimension_numbers<[1], [0], [0], [1], [0, 0, 1, 1], [], []>} : vector<32x32xbf16>, vector<32x96xbf16>, vector<32x96xf32> -> vector<32x96xf32>
    %25 = vector.broadcast %15 : vector<1x96xf32> to vector<32x96xf32>
    %26 = arith.addf %24, %25 : vector<32x96xf32>
    %27 = vector.extract_strided_slice %23 {offsets = [0, 0], sizes = [16, 96], strides = [1, 1]} : vector<32x96xf32> to vector<16x96xf32>
    %28 = vector.extract_strided_slice %27 {offsets = [0, 0], sizes = [16, 64], strides = [1, 1]} : vector<16x96xf32> to vector<16x64xf32>
    %29 = vector.extract_strided_slice %14 {offsets = [0, 0], sizes = [1, 64], strides = [1, 1]} : vector<1x96xf32> to vector<1x64xf32>
    %30 = vector.broadcast %29 : vector<1x64xf32> to vector<16x64xf32>
    %31 = arith.addf %28, %30 : vector<16x64xf32>
    %32 = arith.negf %31 : vector<16x64xf32>
    %33 = math.exp %32 : vector<16x64xf32>
    %cst_26 = arith.constant 1.000000e+00 : f32
    %34 = vector.broadcast %cst_26 : f32 to vector<16x64xf32>
    %35 = arith.addf %34, %33 : vector<16x64xf32>
    %36 = arith.divf %34, %35 : vector<16x64xf32>
    %37 = vector.extract_strided_slice %36 {offsets = [0, 32], sizes = [16, 32], strides = [1, 1]} : vector<16x64xf32> to vector<16x32xf32>
    %38 = vector.extract_strided_slice %27 {offsets = [0, 64], sizes = [16, 32], strides = [1, 1]} : vector<16x96xf32> to vector<16x32xf32>
    %39 = vector.extract_strided_slice %36 {offsets = [0, 0], sizes = [16, 32], strides = [1, 1]} : vector<16x64xf32> to vector<16x32xf32>
    %40 = vector.extract_strided_slice %14 {offsets = [0, 64], sizes = [1, 32], strides = [1, 1]} : vector<1x96xf32> to vector<1x32xf32>
    %41 = vector.broadcast %40 : vector<1x32xf32> to vector<16x32xf32>
    %42 = arith.mulf %39, %41 : vector<16x32xf32>
    %43 = arith.addf %38, %42 : vector<16x32xf32>
    %44 = math.tanh %43 : vector<16x32xf32>
    %cst_27 = arith.constant 1.000000e+00 : f32
    %45 = vector.broadcast %cst_27 : f32 to vector<16x32xf32>
    %46 = arith.subf %45, %37 : vector<16x32xf32>
    %47 = arith.mulf %46, %44 : vector<16x32xf32>
    %48 = vector.extract_strided_slice %23 {offsets = [16, 0], sizes = [16, 96], strides = [1, 1]} : vector<32x96xf32> to vector<16x96xf32>
    %49 = arith.truncf %47 : vector<16x32xf32> to vector<16x32xbf16>
    %cst_28 = arith.constant dense<0.000000e+00> : vector<16x96xf32>
    %50 = tpu.matmul %49, %10, %cst_28 {dimension_numbers = #tpu.dot_dimension_numbers<[1], [0], [0], [1], [0, 0, 1, 1], [], []>} : vector<16x32xbf16>, vector<32x96xbf16>, vector<16x96xf32> -> vector<16x96xf32>
    %51 = vector.broadcast %14 : vector<1x96xf32> to vector<16x96xf32>
    %52 = arith.addf %50, %51 : vector<16x96xf32>
    %53 = vector.extract_strided_slice %48 {offsets = [0, 0], sizes = [16, 64], strides = [1, 1]} : vector<16x96xf32> to vector<16x64xf32>
    %54 = vector.extract_strided_slice %52 {offsets = [0, 0], sizes = [16, 64], strides = [1, 1]} : vector<16x96xf32> to vector<16x64xf32>
    %55 = arith.addf %53, %54 : vector<16x64xf32>
    %56 = arith.negf %55 : vector<16x64xf32>
    %57 = math.exp %56 : vector<16x64xf32>
    %cst_29 = arith.constant 1.000000e+00 : f32
    %58 = vector.broadcast %cst_29 : f32 to vector<16x64xf32>
    %59 = arith.addf %58, %57 : vector<16x64xf32>
    %60 = arith.divf %58, %59 : vector<16x64xf32>
    %61 = vector.extract_strided_slice %60 {offsets = [0, 32], sizes = [16, 32], strides = [1, 1]} : vector<16x64xf32> to vector<16x32xf32>
    %62 = vector.extract_strided_slice %48 {offsets = [0, 64], sizes = [16, 32], strides = [1, 1]} : vector<16x96xf32> to vector<16x32xf32>
    %63 = vector.extract_strided_slice %60 {offsets = [0, 0], sizes = [16, 32], strides = [1, 1]} : vector<16x64xf32> to vector<16x32xf32>
    %64 = vector.extract_strided_slice %52 {offsets = [0, 64], sizes = [16, 32], strides = [1, 1]} : vector<16x96xf32> to vector<16x32xf32>
    %65 = arith.mulf %63, %64 : vector<16x32xf32>
    %66 = arith.addf %62, %65 : vector<16x32xf32>
    %67 = math.tanh %66 : vector<16x32xf32>
    %cst_30 = arith.constant 1.000000e+00 : f32
    %68 = vector.broadcast %cst_30 : f32 to vector<16x32xf32>
    %69 = arith.subf %68, %61 : vector<16x32xf32>
    %70 = arith.mulf %69, %67 : vector<16x32xf32>
    %71 = arith.mulf %61, %47 : vector<16x32xf32>
    %72 = arith.addf %70, %71 : vector<16x32xf32>
    %73 = vector.extract_strided_slice %26 {offsets = [16, 0], sizes = [16, 96], strides = [1, 1]} : vector<32x96xf32> to vector<16x96xf32>
    %74 = vector.extract_strided_slice %73 {offsets = [0, 0], sizes = [16, 64], strides = [1, 1]} : vector<16x96xf32> to vector<16x64xf32>
    %75 = vector.extract_strided_slice %16 {offsets = [0, 0], sizes = [1, 64], strides = [1, 1]} : vector<1x96xf32> to vector<1x64xf32>
    %76 = vector.broadcast %75 : vector<1x64xf32> to vector<16x64xf32>
    %77 = arith.addf %74, %76 : vector<16x64xf32>
    %78 = arith.negf %77 : vector<16x64xf32>
    %79 = math.exp %78 : vector<16x64xf32>
    %cst_31 = arith.constant 1.000000e+00 : f32
    %80 = vector.broadcast %cst_31 : f32 to vector<16x64xf32>
    %81 = arith.addf %80, %79 : vector<16x64xf32>
    %82 = arith.divf %80, %81 : vector<16x64xf32>
    %83 = vector.extract_strided_slice %82 {offsets = [0, 32], sizes = [16, 32], strides = [1, 1]} : vector<16x64xf32> to vector<16x32xf32>
    %84 = vector.extract_strided_slice %73 {offsets = [0, 64], sizes = [16, 32], strides = [1, 1]} : vector<16x96xf32> to vector<16x32xf32>
    %85 = vector.extract_strided_slice %82 {offsets = [0, 0], sizes = [16, 32], strides = [1, 1]} : vector<16x64xf32> to vector<16x32xf32>
    %86 = vector.extract_strided_slice %16 {offsets = [0, 64], sizes = [1, 32], strides = [1, 1]} : vector<1x96xf32> to vector<1x32xf32>
    %87 = vector.broadcast %86 : vector<1x32xf32> to vector<16x32xf32>
    %88 = arith.mulf %85, %87 : vector<16x32xf32>
    %89 = arith.addf %84, %88 : vector<16x32xf32>
    %90 = math.tanh %89 : vector<16x32xf32>
    %cst_32 = arith.constant 1.000000e+00 : f32
    %91 = vector.broadcast %cst_32 : f32 to vector<16x32xf32>
    %92 = arith.subf %91, %83 : vector<16x32xf32>
    %93 = arith.mulf %92, %90 : vector<16x32xf32>
    %94 = vector.extract_strided_slice %26 {offsets = [0, 0], sizes = [16, 96], strides = [1, 1]} : vector<32x96xf32> to vector<16x96xf32>
    %95 = arith.truncf %93 : vector<16x32xf32> to vector<16x32xbf16>
    %cst_33 = arith.constant dense<0.000000e+00> : vector<16x96xf32>
    %96 = tpu.matmul %95, %11, %cst_33 {dimension_numbers = #tpu.dot_dimension_numbers<[1], [0], [0], [1], [0, 0, 1, 1], [], []>} : vector<16x32xbf16>, vector<32x96xbf16>, vector<16x96xf32> -> vector<16x96xf32>
    %97 = vector.broadcast %16 : vector<1x96xf32> to vector<16x96xf32>
    %98 = arith.addf %96, %97 : vector<16x96xf32>
    %99 = vector.extract_strided_slice %94 {offsets = [0, 0], sizes = [16, 64], strides = [1, 1]} : vector<16x96xf32> to vector<16x64xf32>
    %100 = vector.extract_strided_slice %98 {offsets = [0, 0], sizes = [16, 64], strides = [1, 1]} : vector<16x96xf32> to vector<16x64xf32>
    %101 = arith.addf %99, %100 : vector<16x64xf32>
    %102 = arith.negf %101 : vector<16x64xf32>
    %103 = math.exp %102 : vector<16x64xf32>
    %cst_34 = arith.constant 1.000000e+00 : f32
    %104 = vector.broadcast %cst_34 : f32 to vector<16x64xf32>
    %105 = arith.addf %104, %103 : vector<16x64xf32>
    %106 = arith.divf %104, %105 : vector<16x64xf32>
    %107 = vector.extract_strided_slice %106 {offsets = [0, 32], sizes = [16, 32], strides = [1, 1]} : vector<16x64xf32> to vector<16x32xf32>
    %108 = vector.extract_strided_slice %94 {offsets = [0, 64], sizes = [16, 32], strides = [1, 1]} : vector<16x96xf32> to vector<16x32xf32>
    %109 = vector.extract_strided_slice %106 {offsets = [0, 0], sizes = [16, 32], strides = [1, 1]} : vector<16x64xf32> to vector<16x32xf32>
    %110 = vector.extract_strided_slice %98 {offsets = [0, 64], sizes = [16, 32], strides = [1, 1]} : vector<16x96xf32> to vector<16x32xf32>
    %111 = arith.mulf %109, %110 : vector<16x32xf32>
    %112 = arith.addf %108, %111 : vector<16x32xf32>
    %113 = math.tanh %112 : vector<16x32xf32>
    %cst_35 = arith.constant 1.000000e+00 : f32
    %114 = vector.broadcast %cst_35 : f32 to vector<16x32xf32>
    %115 = arith.subf %114, %107 : vector<16x32xf32>
    %116 = arith.mulf %115, %113 : vector<16x32xf32>
    %117 = arith.mulf %107, %93 : vector<16x32xf32>
    %118 = arith.addf %116, %117 : vector<16x32xf32>
    %119 = tpu.concatenate %47, %118 in 1 : vector<16x32xf32>, vector<16x32xf32> -> vector<16x64xf32>
    %120 = tpu.concatenate %72, %93 in 1 : vector<16x32xf32>, vector<16x32xf32> -> vector<16x64xf32>
    %121 = tpu.concatenate %119, %120 in 0 : vector<16x64xf32>, vector<16x64xf32> -> vector<32x64xf32>
    %122 = arith.truncf %121 : vector<32x64xf32> to vector<32x64xbf16>
    %cst_36 = arith.constant dense<0.000000e+00> : vector<32x96xf32>
    %123 = tpu.matmul %122, %9, %cst_36 {dimension_numbers = #tpu.dot_dimension_numbers<[1], [0], [0], [1], [0, 0, 1, 1], [], []>} : vector<32x64xbf16>, vector<64x96xbf16>, vector<32x96xf32> -> vector<32x96xf32>
    %124 = vector.broadcast %19 : vector<1x96xf32> to vector<32x96xf32>
    %125 = arith.addf %123, %124 : vector<32x96xf32>
    %126 = vector.extract_strided_slice %122 {offsets = [0, 0], sizes = [16, 64], strides = [1, 1]} : vector<32x64xbf16> to vector<16x64xbf16>
    %cst_37 = arith.constant dense<0.000000e+00> : vector<16x96xf32>
    %127 = tpu.matmul %126, %8, %cst_37 {dimension_numbers = #tpu.dot_dimension_numbers<[1], [0], [0], [1], [0, 0, 1, 1], [], []>} : vector<16x64xbf16>, vector<64x96xbf16>, vector<16x96xf32> -> vector<16x96xf32>
    %128 = vector.broadcast %17 : vector<1x96xf32> to vector<16x96xf32>
    %129 = arith.addf %127, %128 : vector<16x96xf32>
    %130 = vector.extract_strided_slice %129 {offsets = [0, 0], sizes = [16, 64], strides = [1, 1]} : vector<16x96xf32> to vector<16x64xf32>
    %131 = vector.extract_strided_slice %18 {offsets = [0, 0], sizes = [1, 64], strides = [1, 1]} : vector<1x96xf32> to vector<1x64xf32>
    %132 = vector.broadcast %131 : vector<1x64xf32> to vector<16x64xf32>
    %133 = arith.addf %130, %132 : vector<16x64xf32>
    %134 = arith.negf %133 : vector<16x64xf32>
    %135 = math.exp %134 : vector<16x64xf32>
    %cst_38 = arith.constant 1.000000e+00 : f32
    %136 = vector.broadcast %cst_38 : f32 to vector<16x64xf32>
    %137 = arith.addf %136, %135 : vector<16x64xf32>
    %138 = arith.divf %136, %137 : vector<16x64xf32>
    %139 = vector.extract_strided_slice %138 {offsets = [0, 32], sizes = [16, 32], strides = [1, 1]} : vector<16x64xf32> to vector<16x32xf32>
    %140 = vector.extract_strided_slice %129 {offsets = [0, 64], sizes = [16, 32], strides = [1, 1]} : vector<16x96xf32> to vector<16x32xf32>
    %141 = vector.extract_strided_slice %138 {offsets = [0, 0], sizes = [16, 32], strides = [1, 1]} : vector<16x64xf32> to vector<16x32xf32>
    %142 = vector.extract_strided_slice %18 {offsets = [0, 64], sizes = [1, 32], strides = [1, 1]} : vector<1x96xf32> to vector<1x32xf32>
    %143 = vector.broadcast %142 : vector<1x32xf32> to vector<16x32xf32>
    %144 = arith.mulf %141, %143 : vector<16x32xf32>
    %145 = arith.addf %140, %144 : vector<16x32xf32>
    %146 = math.tanh %145 : vector<16x32xf32>
    %cst_39 = arith.constant 1.000000e+00 : f32
    %147 = vector.broadcast %cst_39 : f32 to vector<16x32xf32>
    %148 = arith.subf %147, %139 : vector<16x32xf32>
    %149 = arith.mulf %148, %146 : vector<16x32xf32>
    %150 = vector.extract_strided_slice %125 {offsets = [16, 0], sizes = [16, 96], strides = [1, 1]} : vector<32x96xf32> to vector<16x96xf32>
    %151 = vector.extract_strided_slice %150 {offsets = [0, 0], sizes = [16, 64], strides = [1, 1]} : vector<16x96xf32> to vector<16x64xf32>
    %152 = vector.extract_strided_slice %20 {offsets = [0, 0], sizes = [1, 64], strides = [1, 1]} : vector<1x96xf32> to vector<1x64xf32>
    %153 = vector.broadcast %152 : vector<1x64xf32> to vector<16x64xf32>
    %154 = arith.addf %151, %153 : vector<16x64xf32>
    %155 = arith.negf %154 : vector<16x64xf32>
    %156 = math.exp %155 : vector<16x64xf32>
    %cst_40 = arith.constant 1.000000e+00 : f32
    %157 = vector.broadcast %cst_40 : f32 to vector<16x64xf32>
    %158 = arith.addf %157, %156 : vector<16x64xf32>
    %159 = arith.divf %157, %158 : vector<16x64xf32>
    %160 = vector.extract_strided_slice %159 {offsets = [0, 32], sizes = [16, 32], strides = [1, 1]} : vector<16x64xf32> to vector<16x32xf32>
    %161 = vector.extract_strided_slice %150 {offsets = [0, 64], sizes = [16, 32], strides = [1, 1]} : vector<16x96xf32> to vector<16x32xf32>
    %162 = vector.extract_strided_slice %159 {offsets = [0, 0], sizes = [16, 32], strides = [1, 1]} : vector<16x64xf32> to vector<16x32xf32>
    %163 = vector.extract_strided_slice %20 {offsets = [0, 64], sizes = [1, 32], strides = [1, 1]} : vector<1x96xf32> to vector<1x32xf32>
    %164 = vector.broadcast %163 : vector<1x32xf32> to vector<16x32xf32>
    %165 = arith.mulf %162, %164 : vector<16x32xf32>
    %166 = arith.addf %161, %165 : vector<16x32xf32>
    %167 = math.tanh %166 : vector<16x32xf32>
    %cst_41 = arith.constant 1.000000e+00 : f32
    %168 = vector.broadcast %cst_41 : f32 to vector<16x32xf32>
    %169 = arith.subf %168, %160 : vector<16x32xf32>
    %170 = arith.mulf %169, %167 : vector<16x32xf32>
    %171 = vector.extract_strided_slice %125 {offsets = [0, 0], sizes = [16, 96], strides = [1, 1]} : vector<32x96xf32> to vector<16x96xf32>
    %172 = arith.truncf %170 : vector<16x32xf32> to vector<16x32xbf16>
    %cst_42 = arith.constant dense<0.000000e+00> : vector<16x96xf32>
    %173 = tpu.matmul %172, %12, %cst_42 {dimension_numbers = #tpu.dot_dimension_numbers<[1], [0], [0], [1], [0, 0, 1, 1], [], []>} : vector<16x32xbf16>, vector<32x96xbf16>, vector<16x96xf32> -> vector<16x96xf32>
    %174 = vector.broadcast %20 : vector<1x96xf32> to vector<16x96xf32>
    %175 = arith.addf %173, %174 : vector<16x96xf32>
    %176 = vector.extract_strided_slice %171 {offsets = [0, 0], sizes = [16, 64], strides = [1, 1]} : vector<16x96xf32> to vector<16x64xf32>
    %177 = vector.extract_strided_slice %175 {offsets = [0, 0], sizes = [16, 64], strides = [1, 1]} : vector<16x96xf32> to vector<16x64xf32>
    %178 = arith.addf %176, %177 : vector<16x64xf32>
    %179 = arith.negf %178 : vector<16x64xf32>
    %180 = math.exp %179 : vector<16x64xf32>
    %cst_43 = arith.constant 1.000000e+00 : f32
    %181 = vector.broadcast %cst_43 : f32 to vector<16x64xf32>
    %182 = arith.addf %181, %180 : vector<16x64xf32>
    %183 = arith.divf %181, %182 : vector<16x64xf32>
    %184 = vector.extract_strided_slice %183 {offsets = [0, 32], sizes = [16, 32], strides = [1, 1]} : vector<16x64xf32> to vector<16x32xf32>
    %185 = vector.extract_strided_slice %171 {offsets = [0, 64], sizes = [16, 32], strides = [1, 1]} : vector<16x96xf32> to vector<16x32xf32>
    %186 = vector.extract_strided_slice %183 {offsets = [0, 0], sizes = [16, 32], strides = [1, 1]} : vector<16x64xf32> to vector<16x32xf32>
    %187 = vector.extract_strided_slice %175 {offsets = [0, 64], sizes = [16, 32], strides = [1, 1]} : vector<16x96xf32> to vector<16x32xf32>
    %188 = arith.mulf %186, %187 : vector<16x32xf32>
    %189 = arith.addf %185, %188 : vector<16x32xf32>
    %190 = math.tanh %189 : vector<16x32xf32>
    %cst_44 = arith.constant 1.000000e+00 : f32
    %191 = vector.broadcast %cst_44 : f32 to vector<16x32xf32>
    %192 = arith.subf %191, %184 : vector<16x32xf32>
    %193 = arith.mulf %192, %190 : vector<16x32xf32>
    %194 = arith.mulf %184, %170 : vector<16x32xf32>
    %195 = arith.addf %193, %194 : vector<16x32xf32>
    %c0_45 = arith.constant 0 : index
    %c0_46 = arith.constant 0 : index
    %196 = vector.load %arg9[%c0_45, %c0_46] : memref<2x32xf32, #tpu.memory_space<vmem>>, vector<1x32xf32>
    %c1_47 = arith.constant 1 : index
    %c0_48 = arith.constant 0 : index
    %197 = vector.load %arg9[%c1_47, %c0_48] : memref<2x32xf32, #tpu.memory_space<vmem>>, vector<1x32xf32>
    %198 = vector.broadcast %196 : vector<1x32xf32> to vector<16x32xf32>
    %199 = arith.mulf %149, %198 : vector<16x32xf32>
    %cst_49 = arith.constant dense<0.000000e+00> : vector<16xf32>
    %200 = vector.multi_reduction <add>, %199, %cst_49 [1] : vector<16x32xf32> to vector<16xf32>
    %201 = vector.shape_cast %200 : vector<16xf32> to vector<16x1xf32>
    %202 = vector.broadcast %197 : vector<1x32xf32> to vector<16x32xf32>
    %203 = arith.mulf %195, %202 : vector<16x32xf32>
    %cst_50 = arith.constant dense<0.000000e+00> : vector<16xf32>
    %204 = vector.multi_reduction <add>, %203, %cst_50 [1] : vector<16x32xf32> to vector<16xf32>
    %205 = vector.shape_cast %204 : vector<16xf32> to vector<16x1xf32>
    %206 = arith.addf %201, %205 : vector<16x1xf32>
    %c0_51 = arith.constant 0 : index
    %c0_52 = arith.constant 0 : index
    %207 = vector.load %arg10[%c0_51, %c0_52] : memref<1x1xf32, #tpu.memory_space<vmem>>, vector<1x1xf32>
    %208 = vector.broadcast %207 : vector<1x1xf32> to vector<16x1xf32>
    %209 = arith.addf %206, %208 : vector<16x1xf32>
    %cst_53 = arith.constant 5.000000e-01 : f32
    %210 = vector.broadcast %cst_53 : f32 to vector<16x1xf32>
    %211 = arith.mulf %210, %209 : vector<16x1xf32>
    %cst_54 = arith.constant 4.471500e-02 : f32
    %212 = vector.broadcast %cst_54 : f32 to vector<16x1xf32>
    %213 = arith.mulf %212, %209 : vector<16x1xf32>
    %214 = arith.mulf %213, %209 : vector<16x1xf32>
    %215 = arith.mulf %214, %209 : vector<16x1xf32>
    %216 = arith.addf %209, %215 : vector<16x1xf32>
    %cst_55 = arith.constant 0.797884583 : f32
    %217 = vector.broadcast %cst_55 : f32 to vector<16x1xf32>
    %218 = arith.mulf %217, %216 : vector<16x1xf32>
    %219 = math.tanh %218 : vector<16x1xf32>
    %cst_56 = arith.constant 1.000000e+00 : f32
    %220 = vector.broadcast %cst_56 : f32 to vector<16x1xf32>
    %221 = arith.addf %220, %219 : vector<16x1xf32>
    %222 = arith.mulf %211, %221 : vector<16x1xf32>
    %c0_57 = arith.constant 0 : index
    %c0_58 = arith.constant 0 : index
    %223 = vector.load %arg4[%c0_57, %c0_58] : memref<16x8xf32, #tpu.memory_space<vmem>>, vector<16x8xf32>
    %cst_59 = arith.constant 0.000000e+00 : f32
    %224 = vector.broadcast %cst_59 : f32 to vector<16x8xf32>
    %225 = arith.cmpf ogt, %223, %224 : vector<16x8xf32>
    %cst_60 = arith.constant 0xFF800000 : f32
    %226 = vector.shape_cast %222 : vector<16x1xf32> to vector<16x1xf32>
    %227 = vector.broadcast %226 : vector<16x1xf32> to vector<16x8xf32>
    %228 = vector.broadcast %cst_60 : f32 to vector<16x8xf32>
    %229 = arith.select %225, %227, %228 : vector<16x8xi1>, vector<16x8xf32>
    %cst_61 = arith.constant dense<0xFF800000> : vector<8xf32>
    %230 = vector.multi_reduction <maximumf>, %229, %cst_61 [0] : vector<16x8xf32> to vector<8xf32>
    %231 = vector.shape_cast %230 : vector<8xf32> to vector<1x8xf32>
    %cst_62 = arith.constant 0.000000e+00 : f32
    %232 = vector.shape_cast %231 : vector<1x8xf32> to vector<1x8xf32>
    %233 = vector.broadcast %232 : vector<1x8xf32> to vector<16x8xf32>
    %234 = vector.broadcast %cst_62 : f32 to vector<16x8xf32>
    %235 = arith.select %225, %233, %234 : vector<16x8xi1>, vector<16x8xf32>
    %cst_63 = arith.constant dense<0.000000e+00> : vector<16xf32>
    %236 = vector.multi_reduction <add>, %235, %cst_63 [1] : vector<16x8xf32> to vector<16xf32>
    %237 = vector.shape_cast %236 : vector<16xf32> to vector<16x1xf32>
    %238 = arith.subf %222, %237 : vector<16x1xf32>
    %239 = math.exp %238 : vector<16x1xf32>
    %240 = vector.broadcast %239 : vector<16x1xf32> to vector<16x8xf32>
    %241 = arith.mulf %223, %240 : vector<16x8xf32>
    %cst_64 = arith.constant dense<0.000000e+00> : vector<8xf32>
    %242 = vector.multi_reduction <add>, %241, %cst_64 [0] : vector<16x8xf32> to vector<8xf32>
    %243 = vector.shape_cast %242 : vector<8xf32> to vector<1x8xf32>
    %cst_65 = arith.constant 0.000000e+00 : f32
    %244 = vector.shape_cast %243 : vector<1x8xf32> to vector<1x8xf32>
    %245 = vector.broadcast %244 : vector<1x8xf32> to vector<16x8xf32>
    %246 = vector.broadcast %cst_65 : f32 to vector<16x8xf32>
    %247 = arith.select %225, %245, %246 : vector<16x8xi1>, vector<16x8xf32>
    %cst_66 = arith.constant dense<0.000000e+00> : vector<16xf32>
    %248 = vector.multi_reduction <add>, %247, %cst_66 [1] : vector<16x8xf32> to vector<16xf32>
    %249 = vector.shape_cast %248 : vector<16xf32> to vector<16x1xf32>
    %250 = arith.divf %239, %249 : vector<16x1xf32>
    %c0_67 = arith.constant 0 : index
    %c0_68 = arith.constant 0 : index
    %c0_69 = arith.constant 0 : index
    %251 = vector.load %arg3[%c0_67, %c0_68, %c0_69] : memref<1x16x1xf32, #tpu.memory_space<vmem>>, vector<1x16x1xf32>
    %252 = vector.shape_cast %251 : vector<1x16x1xf32> to vector<16x1xf32>
    %253 = arith.addf %222, %252 : vector<16x1xf32>
    %cst_70 = arith.constant 1.000000e+01 : f32
    %254 = vector.broadcast %cst_70 : f32 to vector<16x1xf32>
    %255 = arith.mulf %253, %254 : vector<16x1xf32>
    %cst_71 = arith.constant 0xFF800000 : f32
    %256 = vector.shape_cast %255 : vector<16x1xf32> to vector<16x1xf32>
    %257 = vector.broadcast %256 : vector<16x1xf32> to vector<16x8xf32>
    %258 = vector.broadcast %cst_71 : f32 to vector<16x8xf32>
    %259 = arith.select %225, %257, %258 : vector<16x8xi1>, vector<16x8xf32>
    %cst_72 = arith.constant dense<0xFF800000> : vector<8xf32>
    %260 = vector.multi_reduction <maximumf>, %259, %cst_72 [0] : vector<16x8xf32> to vector<8xf32>
    %261 = vector.shape_cast %260 : vector<8xf32> to vector<1x8xf32>
    %cst_73 = arith.constant 0.000000e+00 : f32
    %262 = vector.shape_cast %261 : vector<1x8xf32> to vector<1x8xf32>
    %263 = vector.broadcast %262 : vector<1x8xf32> to vector<16x8xf32>
    %264 = vector.broadcast %cst_73 : f32 to vector<16x8xf32>
    %265 = arith.select %225, %263, %264 : vector<16x8xi1>, vector<16x8xf32>
    %cst_74 = arith.constant dense<0.000000e+00> : vector<16xf32>
    %266 = vector.multi_reduction <add>, %265, %cst_74 [1] : vector<16x8xf32> to vector<16xf32>
    %267 = vector.shape_cast %266 : vector<16xf32> to vector<16x1xf32>
    %268 = arith.subf %255, %267 : vector<16x1xf32>
    %269 = math.exp %268 : vector<16x1xf32>
    %270 = vector.broadcast %269 : vector<16x1xf32> to vector<16x8xf32>
    %271 = arith.mulf %223, %270 : vector<16x8xf32>
    %cst_75 = arith.constant dense<0.000000e+00> : vector<8xf32>
    %272 = vector.multi_reduction <add>, %271, %cst_75 [0] : vector<16x8xf32> to vector<8xf32>
    %273 = vector.shape_cast %272 : vector<8xf32> to vector<1x8xf32>
    %cst_76 = arith.constant 0.000000e+00 : f32
    %274 = vector.shape_cast %273 : vector<1x8xf32> to vector<1x8xf32>
    %275 = vector.broadcast %274 : vector<1x8xf32> to vector<16x8xf32>
    %276 = vector.broadcast %cst_76 : f32 to vector<16x8xf32>
    %277 = arith.select %225, %275, %276 : vector<16x8xi1>, vector<16x8xf32>
    %cst_77 = arith.constant dense<0.000000e+00> : vector<16xf32>
    %278 = vector.multi_reduction <add>, %277, %cst_77 [1] : vector<16x8xf32> to vector<16xf32>
    %279 = vector.shape_cast %278 : vector<16xf32> to vector<16x1xf32>
    %280 = arith.divf %269, %279 : vector<16x1xf32>
    %281 = arith.mulf %250, %280 : vector<16x1xf32>
    %282 = vector.broadcast %281 : vector<16x1xf32> to vector<16x32xf32>
    %283 = arith.mulf %1, %282 : vector<16x32xf32>
    %c0_78 = arith.constant 0 : index
    %c0_79 = arith.constant 0 : index
    %284 = vector.load %arg5[%c0_78, %c0_79] : memref<8x16xf32, #tpu.memory_space<vmem>>, vector<8x16xf32>
    %cst_80 = arith.constant dense<0.000000e+00> : vector<8x32xf32>
    %285 = tpu.matmul %284, %283, %cst_80 {dimension_numbers = #tpu.dot_dimension_numbers<[1], [0], [0], [1], [0, 0, 1, 1], [], []>} : vector<8x16xf32>, vector<16x32xf32>, vector<8x32xf32> -> vector<8x32xf32>
    %c0_81 = arith.constant 0 : index
    %c0_82 = arith.constant 0 : index
    %c0_83 = arith.constant 0 : index
    %286 = vector.load %arg11[%c0_81, %c0_82, %c0_83] : memref<1x8x32xf32, #tpu.memory_space<vmem>>, vector<1x8x32xf32>
    %287 = vector.shape_cast %286 : vector<1x8x32xf32> to vector<8x32xf32>
    %288 = vector.shape_cast %285 : vector<8x32xf32> to vector<1x8x32xf32>
    tpu.vector_store %arg11[%c0_81, %c0_82, %c0_83], %288 {strides = array<i32>} : memref<1x8x32xf32, #tpu.memory_space<vmem>>, vector<1x8x32xf32>,
    return
  }
  func.func @transform_0(%arg0: i32) -> (i32, i32, i32) {
    %c0_i32 = arith.constant 0 : i32
    %c0_i32_0 = arith.constant 0 : i32
    %c0_i32_1 = arith.constant 0 : i32
    return %arg0, %c0_i32, %c0_i32_0 : i32, i32, i32
  }
  func.func @transform_1(%arg0: i32) -> (i32, i32, i32) {
    %c0_i32 = arith.constant 0 : i32
    %c0_i32_0 = arith.constant 0 : i32
    %c0_i32_1 = arith.constant 0 : i32
    return %arg0, %c0_i32, %c0_i32_0 : i32, i32, i32
  }
  func.func @transform_2(%arg0: i32) -> (i32, i32, i32) {
    %c0_i32 = arith.constant 0 : i32
    %c0_i32_0 = arith.constant 0 : i32
    %c0_i32_1 = arith.constant 0 : i32
    return %arg0, %c0_i32, %c0_i32_0 : i32, i32, i32
  }
  func.func @transform_3(%arg0: i32) -> (i32, i32) {
    %c0_i32 = arith.constant 0 : i32
    %c0_i32_0 = arith.constant 0 : i32
    %c0_i32_1 = arith.constant 0 : i32
    return %c0_i32, %c0_i32_0 : i32, i32
  }
  func.func @transform_4(%arg0: i32) -> (i32, i32) {
    %c0_i32 = arith.constant 0 : i32
    %c0_i32_0 = arith.constant 0 : i32
    %c0_i32_1 = arith.constant 0 : i32
    return %c0_i32, %c0_i32_0 : i32, i32
  }
  func.func @transform_5(%arg0: i32) -> (i32, i32) {
    %c0_i32 = arith.constant 0 : i32
    %c0_i32_0 = arith.constant 0 : i32
    %c0_i32_1 = arith.constant 0 : i32
    return %c0_i32, %c0_i32_0 : i32, i32
  }
  func.func @transform_6(%arg0: i32) -> (i32, i32) {
    %c0_i32 = arith.constant 0 : i32
    %c0_i32_0 = arith.constant 0 : i32
    %c0_i32_1 = arith.constant 0 : i32
    return %c0_i32, %c0_i32_0 : i32, i32
  }
  func.func @transform_7(%arg0: i32) -> (i32, i32) {
    %c0_i32 = arith.constant 0 : i32
    %c0_i32_0 = arith.constant 0 : i32
    %c0_i32_1 = arith.constant 0 : i32
    return %c0_i32, %c0_i32_0 : i32, i32
  }
  func.func @transform_8(%arg0: i32) -> (i32, i32) {
    %c0_i32 = arith.constant 0 : i32
    %c0_i32_0 = arith.constant 0 : i32
    %c0_i32_1 = arith.constant 0 : i32
    return %c0_i32, %c0_i32_0 : i32, i32
  }
  func.func @transform_9(%arg0: i32) -> (i32, i32) {
    %c0_i32 = arith.constant 0 : i32
    %c0_i32_0 = arith.constant 0 : i32
    %c0_i32_1 = arith.constant 0 : i32
    return %c0_i32, %c0_i32_0 : i32, i32
  }
  func.func @transform_10(%arg0: i32) -> (i32, i32, i32) {
    %c0_i32 = arith.constant 0 : i32
    %c0_i32_0 = arith.constant 0 : i32
    %c0_i32_1 = arith.constant 0 : i32
    return %arg0, %c0_i32, %c0_i32_0 : i32, i32, i32
  }
}

</mosaic_0001>

<llo_original>
// kernel: two_stage_attention.1
$region0: #{two_stage_attention.1}
  #allocation0 [shape = 'u32[]', space=smem, size = 0x4, offset = 0x4, fixed_abs, tag = 'smem constant byte address 0x4 - core index']
  #allocation1 [shape = 'u32[144,128]{1,0:T(1,128)}', space=vmem, size = 0x12000, scoped, tag = 'internal scratch']
  #allocation2 [shape = 'f32[1,1]{1,0:T(1,128)S(1)}', space=vmem, size = 0x200, scoped, tag = 'scoped memory for two_stage_attention.1']
  %s0 = inlined_call_operand.vmem [shape: f32[2,16,32], index: 0, kind: input, shape index: {}]
  %s1 = inlined_call_operand.vmem [shape: f32[2,16,32], index: 1, kind: input, shape index: {}]
  %s2 = inlined_call_operand.vmem [shape: f32[2,16,1], index: 2, kind: input, shape index: {}]
  %s3 = inlined_call_operand.vmem [shape: f32[16,8], index: 3, kind: input, shape index: {}]
  %s4 = inlined_call_operand.vmem [shape: f32[8,16], index: 4, kind: input, shape index: {}]
  %s5 = inlined_call_operand.vmem [shape: bf16[192,96], index: 5, kind: input, shape index: {}]
  %s6 = inlined_call_operand.vmem [shape: bf16[96,96], index: 6, kind: input, shape index: {}]
  %s7 = inlined_call_operand.vmem [shape: f32[8,96], index: 7, kind: input, shape index: {}]
  %s8 = inlined_call_operand.vmem [shape: f32[2,32], index: 8, kind: input, shape index: {}]
  %s9 = inlined_call_operand.<no memory space> [shape: f32[1,1], index: 9, kind: input, shape index: {}]
  %s10 = inlined_call_operand.hbm [shape: f32[2,8,32], index: 10, kind: output, shape index: {}]
  %s11 = sld [smem:[#allocation0]]
  $region73: #{two_stage_attention.1} parent=0
    _
  %s13 = ssub.s32 1, %s11
  %s14 = scalar_select 0, %s13, %s11
  %v15 = vstv %s9
  %16 = vst [vmem:[#allocation2] sm:$0x1] %v15
  $region1: #{two_stage_attention.1} parent=0
    #allocation3 [shape = 'u8[8192]{0}', space=vmem, size = 0x2000, scoped, tag = 'output window, operand 0']
    #allocation4 [shape = 's32[2]{0}', space=sflag, size = 0x8, scoped, tag = 'scoped memory for two_stage_attention.1']
    %17 = vsyncpa [#allocation4], 0
    %s18 = scalar_lea.sflag [#allocation4], 1
    %19 = vsyncpa %s18, 0
    loop: start=0, step=1, limit=4
    $region2: #{two_stage_attention.1} parent=1 // loop_pre_header
      _
    $region3: #{two_stage_attention.1} parent=1 // loop_header
      %s21 = sphi 0, %s25
      %p22 = scmp.ge.s32.totalorder %s21, 4
      %s31 = sphi 0, %s33
      %s34 = sphi 0, %s31
      %s35 = sphi 0, %s34
      %s51 = sphi 0, %s35
      %s57 = sphi 0, %s59
      %s60 = sphi 0, %s57
      %s61 = sphi 0, %s60
      %s77 = sphi 0, %s61
      %s83 = sphi 0, %s85
      %s86 = sphi 0, %s83
      %s87 = sphi 0, %s86
      %s103 = sphi 0, %s87
      %s107 = sphi 0, %s107
      %s109 = sphi 0, %s107
      %s110 = sphi 0, %s109
      %s124 = sphi 0, %s110
      %s128 = sphi 0, %s128
      %s130 = sphi 0, %s128
      %s131 = sphi 0, %s130
      %s145 = sphi 0, %s131
      %s149 = sphi 0, %s149
      %s151 = sphi 0, %s149
      %s152 = sphi 0, %s151
      %s166 = sphi 0, %s152
      %s170 = sphi 0, %s170
      %s172 = sphi 0, %s170
      %s173 = sphi 0, %s172
      %s187 = sphi 0, %s173
      %s191 = sphi 0, %s191
      %s193 = sphi 0, %s191
      %s194 = sphi 0, %s193
      %s208 = sphi 0, %s194
      %s212 = sphi 0, %s212
      %s214 = sphi 0, %s212
      %s215 = sphi 0, %s214
      %s229 = sphi 0, %s215
      %s233 = sphi 0, %s233
      %s235 = sphi 0, %s233
      %s236 = sphi 0, %s235
      %s250 = sphi 0, %s236
      %s256 = sphi 0, %s258
      %s259 = sphi 0, %s256
      %s260 = sphi 0, %s259
      %s276 = sphi 0, %s260
    $region4: #{two_stage_attention.1} parent=1 // loop_header_branch
      %24 = sbr.rel (%p22) target = $region8
    $region5: #{two_stage_attention.1} parent=1 // loop_body
      %s26 = ssub.s32 %s21, 1
      %s27 = ssub.s32 %s21, 2
      %s28 = sadd.s32 %s21, 1
      %s29 = ssub.s32 %s21, %s28
      %p30 = scmp.eq.s32.totalorder %s29, 0
      %s32 = sadd.s32 %s31, 1
      %s33 = scalar_select %p30, %s31, %s32
      %p36 = pneg %p30
      %p37 = scmp.eq.s32.totalorder %s21, 1
      %p38 = por %p36, %p37
      %p39 = scmp.ne.s32.totalorder %s31, %s34
      %p40 = scmp.eq.s32.totalorder %s21, 0
      %p41 = por %p39, %p40
      %p42 = scmp.ne.s32.totalorder %s31, %s34
      %p43 = scmp.eq.s32.totalorder %s26, 1
      %p44 = por %p42, %p43
      %p45 = scmp.ne.s32.totalorder %s34, %s35
      %p46 = scmp.eq.s32.totalorder %s26, 0
      %p47 = por %p45, %p46
      %p48 = scmp.ne.s32.totalorder %s34, %s35
      %p49 = scmp.eq.s32.totalorder %s27, 1
      %p50 = por %p48, %p49
      %p52 = scmp.ne.s32.totalorder %s35, %s51
      %p53 = scmp.eq.s32.totalorder %s27, 0
      %p54 = por %p52, %p53
      %s55 = ssub.s32 %s21, %s28
      %p56 = scmp.eq.s32.totalorder %s55, 0
      %s58 = sadd.s32 %s57, 1
      %s59 = scalar_select %p56, %s57, %s58
      %p62 = pneg %p56
      %p63 = scmp.eq.s32.totalorder %s21, 1
      %p64 = por %p62, %p63
      %p65 = scmp.ne.s32.totalorder %s57, %s60
      %p66 = scmp.eq.s32.totalorder %s21, 0
      %p67 = por %p65, %p66
      %p68 = scmp.ne.s32.totalorder %s57, %s60
      %p69 = scmp.eq.s32.totalorder %s26, 1
      %p70 = por %p68, %p69
      %p71 = scmp.ne.s32.totalorder %s60, %s61
      %p72 = scmp.eq.s32.totalorder %s26, 0
      %p73 = por %p71, %p72
      %p74 = scmp.ne.s32.totalorder %s60, %s61
      %p75 = scmp.eq.s32.totalorder %s27, 1
      %p76 = por %p74, %p75
      %p78 = scmp.ne.s32.totalorder %s61, %s77
      %p79 = scmp.eq.s32.totalorder %s27, 0
      %p80 = por %p78, %p79
      %s81 = ssub.s32 %s21, %s28
      %p82 = scmp.eq.s32.totalorder %s81, 0
      %s84 = sadd.s32 %s83, 1
      %s85 = scalar_select %p82, %s83, %s84
      %p88 = pneg %p82
      %p89 = scmp.eq.s32.totalorder %s21, 1
      %p90 = por %p88, %p89
      %p91 = scmp.ne.s32.totalorder %s83, %s86
      %p92 = scmp.eq.s32.totalorder %s21, 0
      %p93 = por %p91, %p92
      %p94 = scmp.ne.s32.totalorder %s83, %s86
      %p95 = scmp.eq.s32.totalorder %s26, 1
      %p96 = por %p94, %p95
      %p97 = scmp.ne.s32.totalorder %s86, %s87
      %p98 = scmp.eq.s32.totalorder %s26, 0
      %p99 = por %p97, %p98
      %p100 = scmp.ne.s32.totalorder %s86, %s87
      %p101 = scmp.eq.s32.totalorder %s27, 1
      %p102 = por %p100, %p101
      %p104 = scmp.ne.s32.totalorder %s87, %s103
      %p105 = scmp.eq.s32.totalorder %s27, 0
      %p106 = por %p104, %p105
      %s108 = sadd.s32 %s107, 1
      %p111 = scmp.eq.s32.totalorder %s21, 1
      %p112 = scmp.ne.s32.totalorder %s107, %s109
      %p113 = scmp.eq.s32.totalorder %s21, 0
      %p114 = por %p112, %p113
      %p115 = scmp.ne.s32.totalorder %s107, %s109
      %p116 = scmp.eq.s32.totalorder %s26, 1
      %p117 = por %p115, %p116
      %p118 = scmp.ne.s32.totalorder %s109, %s110
      %p119 = scmp.eq.s32.totalorder %s26, 0
      %p120 = por %p118, %p119
      %p121 = scmp.ne.s32.totalorder %s109, %s110
      %p122 = scmp.eq.s32.totalorder %s27, 1
      %p123 = por %p121, %p122
      %p125 = scmp.ne.s32.totalorder %s110, %s124
      %p126 = scmp.eq.s32.totalorder %s27, 0
      %p127 = por %p125, %p126
      %s129 = sadd.s32 %s128, 1
      %p132 = scmp.eq.s32.totalorder %s21, 1
      %p133 = scmp.ne.s32.totalorder %s128, %s130
      %p134 = scmp.eq.s32.totalorder %s21, 0
      %p135 = por %p133, %p134
      %p136 = scmp.ne.s32.totalorder %s128, %s130
      %p137 = scmp.eq.s32.totalorder %s26, 1
      %p138 = por %p136, %p137
      %p139 = scmp.ne.s32.totalorder %s130, %s131
      %p140 = scmp.eq.s32.totalorder %s26, 0
      %p141 = por %p139, %p140
      %p142 = scmp.ne.s32.totalorder %s130, %s131
      %p143 = scmp.eq.s32.totalorder %s27, 1
      %p144 = por %p142, %p143
      %p146 = scmp.ne.s32.totalorder %s131, %s145
      %p147 = scmp.eq.s32.totalorder %s27, 0
      %p148 = por %p146, %p147
      %s150 = sadd.s32 %s149, 1
      %p153 = scmp.eq.s32.totalorder %s21, 1
      %p154 = scmp.ne.s32.totalorder %s149, %s151
      %p155 = scmp.eq.s32.totalorder %s21, 0
      %p156 = por %p154, %p155
      %p157 = scmp.ne.s32.totalorder %s149, %s151
      %p158 = scmp.eq.s32.totalorder %s26, 1
      %p159 = por %p157, %p158
      %p160 = scmp.ne.s32.totalorder %s151, %s152
      %p161 = scmp.eq.s32.totalorder %s26, 0
      %p162 = por %p160, %p161
      %p163 = scmp.ne.s32.totalorder %s151, %s152
      %p164 = scmp.eq.s32.totalorder %s27, 1
      %p165 = por %p163, %p164
      %p167 = scmp.ne.s32.totalorder %s152, %s166
      %p168 = scmp.eq.s32.totalorder %s27, 0
      %p169 = por %p167, %p168
      %s171 = sadd.s32 %s170, 1
      %p174 = scmp.eq.s32.totalorder %s21, 1
      %p175 = scmp.ne.s32.totalorder %s170, %s172
      %p176 = scmp.eq.s32.totalorder %s21, 0
      %p177 = por %p175, %p176
      %p178 = scmp.ne.s32.totalorder %s170, %s172
      %p179 = scmp.eq.s32.totalorder %s26, 1
      %p180 = por %p178, %p179
      %p181 = scmp.ne.s32.totalorder %s172, %s173
      %p182 = scmp.eq.s32.totalorder %s26, 0
      %p183 = por %p181, %p182
      %p184 = scmp.ne.s32.totalorder %s172, %s173
      %p185 = scmp.eq.s32.totalorder %s27, 1
      %p186 = por %p184, %p185
      %p188 = scmp.ne.s32.totalorder %s173, %s187
      %p189 = scmp.eq.s32.totalorder %s27, 0
      %p190 = por %p188, %p189
      %s192 = sadd.s32 %s191, 1
      %p195 = scmp.eq.s32.totalorder %s21, 1
      %p196 = scmp.ne.s32.totalorder %s191, %s193
      %p197 = scmp.eq.s32.totalorder %s21, 0
      %p198 = por %p196, %p197
      %p199 = scmp.ne.s32.totalorder %s191, %s193
      %p200 = scmp.eq.s32.totalorder %s26, 1
      %p201 = por %p199, %p200
      %p202 = scmp.ne.s32.totalorder %s193, %s194
      %p203 = scmp.eq.s32.totalorder %s26, 0
      %p204 = por %p202, %p203
      %p205 = scmp.ne.s32.totalorder %s193, %s194
      %p206 = scmp.eq.s32.totalorder %s27, 1
      %p207 = por %p205, %p206
      %p209 = scmp.ne.s32.totalorder %s194, %s208
      %p210 = scmp.eq.s32.totalorder %s27, 0
      %p211 = por %p209, %p210
      %s213 = sadd.s32 %s212, 1
      %p216 = scmp.eq.s32.totalorder %s21, 1
      %p217 = scmp.ne.s32.totalorder %s212, %s214
      %p218 = scmp.eq.s32.totalorder %s21, 0
      %p219 = por %p217, %p218
      %p220 = scmp.ne.s32.totalorder %s212, %s214
      %p221 = scmp.eq.s32.totalorder %s26, 1
      %p222 = por %p220, %p221
      %p223 = scmp.ne.s32.totalorder %s214, %s215
      %p224 = scmp.eq.s32.totalorder %s26, 0
      %p225 = por %p223, %p224
      %p226 = scmp.ne.s32.totalorder %s214, %s215
      %p227 = scmp.eq.s32.totalorder %s27, 1
      %p228 = por %p226, %p227
      %p230 = scmp.ne.s32.totalorder %s215, %s229
      %p231 = scmp.eq.s32.totalorder %s27, 0
      %p232 = por %p230, %p231
      %s234 = sadd.s32 %s233, 1
      %p237 = scmp.eq.s32.totalorder %s21, 1
      %p238 = scmp.ne.s32.totalorder %s233, %s235
      %p239 = scmp.eq.s32.totalorder %s21, 0
      %p240 = por %p238, %p239
      %p241 = scmp.ne.s32.totalorder %s233, %s235
      %p242 = scmp.eq.s32.totalorder %s26, 1
      %p243 = por %p241, %p242
      %p244 = scmp.ne.s32.totalorder %s235, %s236
      %p245 = scmp.eq.s32.totalorder %s26, 0
      %p246 = por %p244, %p245
      %p247 = scmp.ne.s32.totalorder %s235, %s236
      %p248 = scmp.eq.s32.totalorder %s27, 1
      %p249 = por %p247, %p248
      %p251 = scmp.ne.s32.totalorder %s236, %s250
      %p252 = scmp.eq.s32.totalorder %s27, 0
      %p253 = por %p251, %p252
      %s254 = ssub.s32 %s21, %s28
      %p255 = scmp.eq.s32.totalorder %s254, 0
      %s257 = sadd.s32 %s256, 1
      %s258 = scalar_select %p255, %s256, %s257
      %p261 = pneg %p255
      %p262 = scmp.eq.s32.totalorder %s21, 1
      %p263 = por %p261, %p262
      %p264 = scmp.ne.s32.totalorder %s256, %s259
      %p265 = scmp.eq.s32.totalorder %s21, 0
      %p266 = por %p264, %p265
      %p267 = scmp.ne.s32.totalorder %s256, %s259
      %p268 = scmp.eq.s32.totalorder %s26, 1
      %p269 = por %p267, %p268
      %p270 = scmp.ne.s32.totalorder %s259, %s260
      %p271 = scmp.eq.s32.totalorder %s26, 0
      %p272 = por %p270, %p271
      %p273 = scmp.ne.s32.totalorder %s259, %s260
      %p274 = scmp.eq.s32.totalorder %s27, 1
      %p275 = por %p273, %p274
      %p277 = scmp.ne.s32.totalorder %s260, %s276
      %p278 = scmp.eq.s32.totalorder %s27, 0
      %p279 = por %p277, %p278
      %p280 = scmp.le.s32.totalorder 1, %s21
      %p281 = scmp.lt.s32.totalorder %s21, 3
      %p282 = pnand %p280, %p281
      %p283 = pneg %p282
      // Predicated region
      $region9: #{two_stage_attention.1} parent=5 // pred_check
        _
      $region10: #{two_stage_attention.1} parent=5 // pred_check_branch
        %285 = sbr.rel (%p282) target = $region12
      $region11: #{two_stage_attention.1} parent=5 // pred_region
        %s286 = ssub.s32 %s21, 1
        // Predicated region
        $region13: #{two_stage_attention.1} parent=11 // pred_check
          %p287 = pneg %p120
        $region14: #{two_stage_attention.1} parent=11 // pred_check_branch
          %289 = sbr.rel (%p287) target = $region16
        $region15: #{two_stage_attention.1} parent=11 // pred_region
          _
        $region16: #{two_stage_attention.1} parent=11 // pred_fallthru
          _
        // Predicated region
        $region17: #{two_stage_attention.1} parent=11 // pred_check
          %p290 = pneg %p141
        $region18: #{two_stage_attention.1} parent=11 // pred_check_branch
          %292 = sbr.rel (%p290) target = $region20
        $region19: #{two_stage_attention.1} parent=11 // pred_region
          _
        $region20: #{two_stage_attention.1} parent=11 // pred_fallthru
          _
        // Predicated region
        $region21: #{two_stage_attention.1} parent=11 // pred_check
          %p293 = pneg %p162
        $region22: #{two_stage_attention.1} parent=11 // pred_check_branch
          %295 = sbr.rel (%p293) target = $region24
        $region23: #{two_stage_attention.1} parent=11 // pred_region
          _
        $region24: #{two_stage_attention.1} parent=11 // pred_fallthru
          _
        // Predicated region
        $region25: #{two_stage_attention.1} parent=11 // pred_check
          %p296 = pneg %p183
        $region26: #{two_stage_attention.1} parent=11 // pred_check_branch
          %298 = sbr.rel (%p296) target = $region28
        $region27: #{two_stage_attention.1} parent=11 // pred_region
          _
        $region28: #{two_stage_attention.1} parent=11 // pred_fallthru
          _
        // Predicated region
        $region29: #{two_stage_attention.1} parent=11 // pred_check
          %p299 = pneg %p204
        $region30: #{two_stage_attention.1} parent=11 // pred_check_branch
          %301 = sbr.rel (%p299) target = $region32
        $region31: #{two_stage_attention.1} parent=11 // pred_region
          _
        $region32: #{two_stage_attention.1} parent=11 // pred_fallthru
          _
        // Predicated region
        $region33: #{two_stage_attention.1} parent=11 // pred_check
          %p302 = pneg %p225
        $region34: #{two_stage_attention.1} parent=11 // pred_check_branch
          %304 = sbr.rel (%p302) target = $region36
        $region35: #{two_stage_attention.1} parent=11 // pred_region
          _
        $region36: #{two_stage_attention.1} parent=11 // pred_fallthru
          _
        // Predicated region
        $region37: #{two_stage_attention.1} parent=11 // pred_check
          %p305 = pneg %p246
        $region38: #{two_stage_attention.1} parent=11 // pred_check_branch
          %307 = sbr.rel (%p305) target = $region40
        $region39: #{two_stage_attention.1} parent=11 // pred_region
          _
        $region40: #{two_stage_attention.1} parent=11 // pred_fallthru
          _
      $region12: #{two_stage_attention.1} parent=5 // pred_fallthru
        _
      %p308 = scmp.lt.s32.totalorder %s21, 2
      // Predicated region
      $region41: #{two_stage_attention.1} parent=5 // pred_check
        %p309 = pneg %p308
      $region42: #{two_stage_attention.1} parent=5 // pred_check_branch
        %311 = sbr.rel (%p309) target = $region44
      $region43: #{two_stage_attention.1} parent=5 // pred_region
        // Predicated region
        $region45: #{two_stage_attention.1} parent=43 // pred_check
          %p312 = pneg %p41
        $region46: #{two_stage_attention.1} parent=43 // pred_check_branch
          %314 = sbr.rel (%p312) target = $region48
        $region47: #{two_stage_attention.1} parent=43 // pred_region
          %p315 = scmp.lt.s32.totalorder %s21, 1
          %s316 = scalar_select %p315, %s21, 1
          %s317 = smul.addr %s316, 2
          %s318 = smul.addr %s317, 8
          %s319 = scalar_lea.vmem %s0, %s318
        $region48: #{two_stage_attention.1} parent=43 // pred_fallthru
          _
        // Predicated region
        $region49: #{two_stage_attention.1} parent=43 // pred_check
          %p320 = pneg %p67
        $region50: #{two_stage_attention.1} parent=43 // pred_check_branch
          %322 = sbr.rel (%p320) target = $region52
        $region51: #{two_stage_attention.1} parent=43 // pred_region
          %p323 = scmp.lt.s32.totalorder %s21, 1
          %s324 = scalar_select %p323, %s21, 1
          %s325 = smul.addr %s324, 2
          %s326 = smul.addr %s325, 8
          %s327 = scalar_lea.vmem %s1, %s326
        $region52: #{two_stage_attention.1} parent=43 // pred_fallthru
          _
        // Predicated region
        $region53: #{two_stage_attention.1} parent=43 // pred_check
          %p328 = pneg %p93
        $region54: #{two_stage_attention.1} parent=43 // pred_check_branch
          %330 = sbr.rel (%p328) target = $region56
        $region55: #{two_stage_attention.1} parent=43 // pred_region
          %p331 = scmp.lt.s32.totalorder %s21, 1
          %s332 = scalar_select %p331, %s21, 1
          %s333 = smul.addr %s332, 2
          %s334 = smul.addr %s333, 8
          %s335 = scalar_lea.vmem %s2, %s334
        $region56: #{two_stage_attention.1} parent=43 // pred_fallthru
          _
      $region44: #{two_stage_attention.1} parent=5 // pred_fallthru
        _
      %p336 = scmp.le.s32.totalorder 1, %s21
      %p337 = scmp.lt.s32.totalorder %s21, 3
      %p338 = pnand %p336, %p337
      %p339 = pneg %p338
      // Predicated region
      $region57: #{two_stage_attention.1} parent=5 // pred_check
        _
      $region58: #{two_stage_attention.1} parent=5 // pred_check_branch
        %341 = sbr.rel (%p338) target = $region60
      $region59: #{two_stage_attention.1} parent=5 // pred_region
        %s342 = ssub.s32 %s21, 1
        %p343 = scmp.lt.s32.totalorder %s26, 1
        %s344 = scalar_select %p343, %s26, 1
        %s345 = smul.addr %s344, 2
        %s346 = smul.addr %s345, 8
        %s347 = scalar_lea.vmem %s0, %s346
        %p348 = pneg %p47
        %p349 = pneg %p44
        %p350 = scmp.lt.s32.totalorder %s26, 1
        %s351 = scalar_select %p350, %s26, 1
        %s352 = smul.addr %s351, 2
        %s353 = smul.addr %s352, 8
        %s354 = scalar_lea.vmem %s1, %s353
        %p355 = pneg %p73
        %p356 = pneg %p70
        %p357 = scmp.lt.s32.totalorder %s26, 1
        %s358 = scalar_select %p357, %s26, 1
        %s359 = smul.addr %s358, 2
        %s360 = smul.addr %s359, 8
        %s361 = scalar_lea.vmem %s2, %s360
        %p362 = pneg %p99
        %p363 = pneg %p96
        %p364 = pneg %p120
        %p365 = pneg %p117
        %p366 = pneg %p141
        %p367 = pneg %p138
        %p368 = pneg %p162
        %p369 = pneg %p159
        %p370 = pneg %p183
        %p371 = pneg %p180
        %p372 = pneg %p204
        %p373 = pneg %p201
        %p374 = pneg %p225
        %p375 = pneg %p222
        %p376 = pneg %p246
        %p377 = pneg %p243
        %p378 = pneg %p272
        %p379 = pneg %p269
        %s380 = sand.u32 %s259, 1
        %s381 = scalar_lea.sflag [#allocation4], %s380
        %s382 = sand.u32 %s259, 1
        %s383 = smul.addr %s382, 8
        %s384 = scalar_lea.vmem [#allocation3], %s383
        %p385 = scmp.lt.s32.totalorder %s26, 1
        %s386 = scalar_select %p385, %s26, 1
        %s387 = smul.addr %s386, 2
        %s388 = smul.addr %s387, 8
        %s389 = scalar_lea.vmem %s0, %s388
        %p390 = scmp.lt.s32.totalorder %s26, 1
        %s391 = scalar_select %p390, %s26, 1
        %s392 = smul.addr %s391, 2
        %s393 = smul.addr %s392, 8
        %s394 = scalar_lea.vmem %s1, %s393
        %p395 = scmp.lt.s32.totalorder %s26, 1
        %s396 = scalar_select %p395, %s26, 1
        %s397 = smul.addr %s396, 2
        %s398 = smul.addr %s397, 8
        %s399 = scalar_lea.vmem %s2, %s398
        %v401 = vld [vmem:[%s389] sm:$0xff]
        %v402 = vld [vmem:[%s389 + $0x8] sm:$0xff]
        %v403 = vld [vmem:[%s394] sm:$0xff]
        %v404 = vld [vmem:[%s394 + $0x8] sm:$0xff]
        %v405 = vpack.c.bf16 %v404, %v403
        %v406 = vpack.c.bf16 %v402, %v401
        %v407 = vld [vmem:[%s5] sm:$0xf]
        %v408 = vld [vmem:[%s5 + $0x4] sm:$0xf]
        %v409 = vld [vmem:[%s5 + $0x8] sm:$0xf]
        %v410 = vld [vmem:[%s5 + $0xc] sm:$0xf]
        %v411 = vld [vmem:[%s5 + $0x10] sm:$0xf]
        %v412 = vld [vmem:[%s5 + $0x14] sm:$0xf]
        %v413 = vld [vmem:[%s5 + $0x18] sm:$0xf]
        %v414 = vld [vmem:[%s5 + $0x1c] sm:$0xf]
        %v415 = vld [vmem:[%s5 + $0x20] sm:$0xf]
        %v416 = vld [vmem:[%s5 + $0x24] sm:$0xf]
        %v417 = vld [vmem:[%s5 + $0x28] sm:$0xf]
        %v418 = vld [vmem:[%s5 + $0x2c] sm:$0xf]
        %v419 = vld [vmem:[%s5 + $0x30] sm:$0xf]
        %v420 = vld [vmem:[%s5 + $0x34] sm:$0xf]
        %v421 = vld [vmem:[%s5 + $0x38] sm:$0xf]
        %v422 = vld [vmem:[%s5 + $0x3c] sm:$0xf]
        %v423 = vld [vmem:[%s5 + $0x40] sm:$0xf]
        %v424 = vld [vmem:[%s5 + $0x44] sm:$0xf]
        %v425 = vld [vmem:[%s5 + $0x48] sm:$0xf]
        %v426 = vld [vmem:[%s5 + $0x4c] sm:$0xf]
        %v427 = vld [vmem:[%s5 + $0x50] sm:$0xf]
        %v428 = vld [vmem:[%s5 + $0x54] sm:$0xf]
        %v429 = vld [vmem:[%s5 + $0x58] sm:$0xf]
        %v430 = vld [vmem:[%s5 + $0x5c] sm:$0xf]
        %v431 = vld [vmem:[%s6] sm:$0xf]
        %v432 = vld [vmem:[%s6 + $0x4] sm:$0xf]
        %v433 = vld [vmem:[%s6 + $0x8] sm:$0xf]
        %v434 = vld [vmem:[%s6 + $0xc] sm:$0xf]
        %v435 = vld [vmem:[%s6 + $0x10] sm:$0xf]
        %v436 = vld [vmem:[%s6 + $0x14] sm:$0xf]
        %v437 = vld [vmem:[%s6 + $0x18] sm:$0xf]
        %v438 = vld [vmem:[%s6 + $0x1c] sm:$0xf]
        %v439 = vld [vmem:[%s6 + $0x20] sm:$0xf]
        %v440 = vld [vmem:[%s6 + $0x24] sm:$0xf]
        %v441 = vld [vmem:[%s6 + $0x28] sm:$0xf]
        %v442 = vld [vmem:[%s6 + $0x2c] sm:$0xf]
        %v443 = vld [vmem:[%s7] sm:$0x1]
        %v444 = vld [vmem:[%s7 + $0x1] sm:$0x1]
        %v445 = vld [vmem:[%s7 + $0x2] sm:$0x1]
        %v446 = vld [vmem:[%s7 + $0x3] sm:$0x1]
        %v447 = vld [vmem:[%s7 + $0x4] sm:$0x1]
        %v448 = vld [vmem:[%s7 + $0x5] sm:$0x1]
        %v449 = vld [vmem:[%s7 + $0x6] sm:$0x1]
        %v450 = vld [vmem:[%s7 + $0x7] sm:$0x1]
        %v451 = vlaneseq
        %v452 = vshrl.u32 %v451, 7
        %v453 = vsub.s32 0, %v452
        %v454 = vrot.slane %v443, %v453
        %v459 = vunpack.c.l.b16 %v407
        %v460 = vunpack.c.l.b16 %v408
        %v461 = vunpack.c.l.b16 %v409
        %v462 = vunpack.c.l.b16 %v410
        %v463 = vpack.c.b16 %v460, %v459
        %v464 = vpack.c.b16 %v462, %v461
        %vm467 = vcmask 261120
        %v469 = vsel %vm467, %v405, 0
        %v472 = vsel %vm467, %v406, 0
        %474 = vmatprep.subr.bf16.mxu0 0
        %475 = vmatpush1.bf16.msra.mxu0 0
        %476 = vmatprep.subr.bf16.mxu0 0
        %477 = vmatpush1.bf16.msra.mxu0 0
        %478 = vmatprep.subr.bf16.mxu0 0
        %479 = vmatpush1.bf16.msra.mxu0 0
        %480 = vmatprep.subr.bf16.mxu0 0
        %481 = vmatpush1.bf16.msra.mxu0 0
        %482 = vmatprep.subr.bf16.mxu0 0
        %483 = vmatpush1.bf16.msra.mxu0 0
        %484 = vmatprep.subr.bf16.mxu0 0
        %485 = vmatpush1.bf16.msra.mxu0 0
        %486 = vmatprep.subr.bf16.mxu0 0
        %487 = vmatpush1.bf16.msra.mxu0 %v464
        %488 = vmatprep.subr.bf16.mxu0 0
        %489 = vmatpush1.bf16.msra.mxu0 %v463
        %490 = vmatprep.subr.bf16.mxu0 0
        %491 = vmatpush2.bf16.msra.mxu0 0
        %492 = vmatprep.subr.bf16.mxu0 0
        %493 = vmatpush2.bf16.msra.mxu0 0
        %494 = vmatprep.subr.bf16.mxu0 0
        %495 = vmatpush2.bf16.msra.mxu0 0
        %496 = vmatprep.subr.bf16.mxu0 0
        %497 = vmatpush2.bf16.msra.mxu0 0
        %498 = vmatprep.subr.bf16.mxu0 0
        %499 = vmatpush2.bf16.msra.mxu0 0
        %500 = vmatprep.subr.bf16.mxu0 0
        %501 = vmatpush2.bf16.msra.mxu0 0
        %502 = vmatprep.subr.bf16.mxu0 0
        %503 = vmatpush2.bf16.msra.mxu0 0
        %504 = vmatprep.subr.bf16.mxu0 0
        %505 = vmatpush2.bf16.msra.mxu0 0
        %506 = vmatprep.mubr.bf16.mxu0 0
        %507 = vmatmul.mubr.bf16.gmra.mxu0 %v469
        %v508 = vpop.f32.mrf.mxu0
        %v509 = vadd.f32 %v454, %v508
        %v510 = vpop.f32.mrf.mxu0
        %v511 = vpop.f32.mrf.mxu0
        %v512 = vadd.f32 %v454, %v511
        %v513 = vpop.f32.mrf.mxu0
        %514 = vmatprep.mubr.bf16.mxu0 0
        %515 = vmatmul.mubr.bf16.gmra.mxu0 %v472
        %v516 = vpop.f32.mrf.mxu0
        %v517 = vadd.f32 %v454, %v516
        %v518 = vpop.f32.mrf.mxu0
        %v519 = vpop.f32.mrf.mxu0
        %v520 = vadd.f32 %v454, %v519
        %v521 = vpop.f32.mrf.mxu0
        %522 = vdwg.mxu0
        %v523 = vlaneseq
        %v524 = vshrl.u32 %v523, 7
        %v525 = vsub.s32 0, %v524
        %v526 = vrot.slane %v445, %v525
        %v531 = vunpack.c.l.b16 %v411
        %v532 = vunpack.c.l.b16 %v412
        %v533 = vunpack.c.l.b16 %v413
        %v534 = vunpack.c.l.b16 %v414
        %v535 = vpack.c.b16 %v532, %v531
        %v536 = vpack.c.b16 %v534, %v533
        %539 = vmatprep.subr.bf16.mxu0 0
        %540 = vmatpush1.bf16.msra.mxu0 0
        %541 = vmatprep.subr.bf16.mxu0 0
        %542 = vmatpush1.bf16.msra.mxu0 0
        %543 = vmatprep.subr.bf16.mxu0 0
        %544 = vmatpush1.bf16.msra.mxu0 0
        %545 = vmatprep.subr.bf16.mxu0 0
        %546 = vmatpush1.bf16.msra.mxu0 0
        %547 = vmatprep.subr.bf16.mxu0 0
        %548 = vmatpush1.bf16.msra.mxu0 0
        %549 = vmatprep.subr.bf16.mxu0 0
        %550 = vmatpush1.bf16.msra.mxu0 0
        %551 = vmatprep.subr.bf16.mxu0 0
        %552 = vmatpush1.bf16.msra.mxu0 %v536
        %553 = vmatprep.subr.bf16.mxu0 0
        %554 = vmatpush1.bf16.msra.mxu0 %v535
        %555 = vmatprep.subr.bf16.mxu0 0
        %556 = vmatpush2.bf16.msra.mxu0 0
        %557 = vmatprep.subr.bf16.mxu0 0
        %558 = vmatpush2.bf16.msra.mxu0 0
        %559 = vmatprep.subr.bf16.mxu0 0
        %560 = vmatpush2.bf16.msra.mxu0 0
        %561 = vmatprep.subr.bf16.mxu0 0
        %562 = vmatpush2.bf16.msra.mxu0 0
        %563 = vmatprep.subr.bf16.mxu0 0
        %564 = vmatpush2.bf16.msra.mxu0 0
        %565 = vmatprep.subr.bf16.mxu0 0
        %566 = vmatpush2.bf16.msra.mxu0 0
        %567 = vmatprep.subr.bf16.mxu0 0
        %568 = vmatpush2.bf16.msra.mxu0 0
        %569 = vmatprep.subr.bf16.mxu0 0
        %570 = vmatpush2.bf16.msra.mxu0 0
        %571 = vmatprep.mubr.bf16.mxu0 0
        %572 = vmatmul.mubr.bf16.gmra.mxu0 %v469
        %v573 = vpop.f32.mrf.mxu0
        %v574 = vadd.f32 %v526, %v573
        %v575 = vpop.f32.mrf.mxu0
        %v576 = vpop.f32.mrf.mxu0
        %v577 = vadd.f32 %v526, %v576
        %v578 = vpop.f32.mrf.mxu0
        %579 = vmatprep.mubr.bf16.mxu0 0
        %580 = vmatmul.mubr.bf16.gmra.mxu0 %v472
        %v581 = vpop.f32.mrf.mxu0
        %v582 = vadd.f32 %v526, %v581
        %v583 = vpop.f32.mrf.mxu0
        %v584 = vpop.f32.mrf.mxu0
        %v585 = vadd.f32 %v526, %v584
        %v586 = vpop.f32.mrf.mxu0
        %587 = vdwg.mxu0
        %v588 = vlaneseq
        %v589 = vshrl.u32 %v588, 7
        %v590 = vsub.s32 0, %v589
        %v591 = vrot.slane %v444, %v590
        %v592 = vadd.f32 %v509, %v591
        %v593 = vadd.f32 %v512, %v591
        %v594 = vxor.u32 %v592, 2147483648
        %v595 = vxor.u32 %v593, 2147483648
        %v596 = vmul.f32 %v594, 1.442695
        %v597 = vpow.pop %v596
        %v598 = vmul.f32 %v595, 1.442695
        %v599 = vpow.pop %v598
        %v600 = vadd.f32 %v597, 1.0
        %v601 = vadd.f32 %v599, 1.0
        %v602 = vrcp.pop %v600
        %v603 = vmul.f32 1.0, %v602
        %v604 = vrcp.pop %v601
        %v605 = vmul.f32 1.0, %v604
        %607 = vrot.lane.b32.xlu0 %v591, 64
        %v608 = vpop.permute.xlu0 %607
        %v610 = vmul.f32 %v603, %v608
        %v611 = vmul.f32 %v605, %v608
        %614 = vrot.lane.b32.xlu0 %v610, 64
        %v615 = vpop.permute.xlu0 %614
        %616 = vrot.lane.b32.xlu0 %v611, 64
        %v617 = vpop.permute.xlu0 %616
        %v620 = vadd.f32 %v509, %v615
        %v621 = vadd.f32 %v512, %v617
        %v622 = vtanh.pop %v620
        %v623 = vtanh.pop %v621
        %v624 = vsub.f32 1.0, %v603
        %v625 = vsub.f32 1.0, %v605
        %628 = vrot.lane.b32.xlu0 %v622, 96
        %v629 = vpop.permute.xlu0 %628
        %630 = vrot.lane.b32.xlu0 %v623, 96
        %v631 = vpop.permute.xlu0 %630
        %v634 = vmul.f32 %v624, %v629
        %v635 = vmul.f32 %v625, %v631
        %v636 = vpack.c.bf16 %v635, %v634
        %638 = vrot.lane.b32.xlu0 %v636, 96
        %v639 = vpop.permute.xlu0 %638
        %v644 = vunpack.c.l.b16 %v431
        %v645 = vunpack.c.l.b16 %v432
        %v646 = vunpack.c.l.b16 %v433
        %v647 = vunpack.c.l.b16 %v434
        %v648 = vpack.c.b16 %v645, %v644
        %v649 = vpack.c.b16 %v647, %v646
        %v653 = vsel %vm467, %v639, 0
        %655 = vmatprep.subr.bf16.mxu0 0
        %656 = vmatpush1.bf16.msra.mxu0 0
        %657 = vmatprep.subr.bf16.mxu0 0
        %658 = vmatpush1.bf16.msra.mxu0 0
        %659 = vmatprep.subr.bf16.mxu0 0
        %660 = vmatpush1.bf16.msra.mxu0 0
        %661 = vmatprep.subr.bf16.mxu0 0
        %662 = vmatpush1.bf16.msra.mxu0 0
        %663 = vmatprep.subr.bf16.mxu0 0
        %664 = vmatpush1.bf16.msra.mxu0 0
        %665 = vmatprep.subr.bf16.mxu0 0
        %666 = vmatpush1.bf16.msra.mxu0 0
        %667 = vmatprep.subr.bf16.mxu0 0
        %668 = vmatpush1.bf16.msra.mxu0 %v649
        %669 = vmatprep.subr.bf16.mxu0 0
        %670 = vmatpush1.bf16.msra.mxu0 %v648
        %671 = vmatprep.subr.bf16.mxu0 0
        %672 = vmatpush2.bf16.msra.mxu0 0
        %673 = vmatprep.subr.bf16.mxu0 0
        %674 = vmatpush2.bf16.msra.mxu0 0
        %675 = vmatprep.subr.bf16.mxu0 0
        %676 = vmatpush2.bf16.msra.mxu0 0
        %677 = vmatprep.subr.bf16.mxu0 0
        %678 = vmatpush2.bf16.msra.mxu0 0
        %679 = vmatprep.subr.bf16.mxu0 0
        %680 = vmatpush2.bf16.msra.mxu0 0
        %681 = vmatprep.subr.bf16.mxu0 0
        %682 = vmatpush2.bf16.msra.mxu0 0
        %683 = vmatprep.subr.bf16.mxu0 0
        %684 = vmatpush2.bf16.msra.mxu0 0
        %685 = vmatprep.subr.bf16.mxu0 0
        %686 = vmatpush2.bf16.msra.mxu0 0
        %687 = vmatprep.mubr.bf16.mxu0 0
        %688 = vmatmul.mubr.bf16.gmra.mxu0 %v653
        %v689 = vpop.f32.mrf.mxu0
        %v690 = vadd.f32 %v591, %v689
        %v691 = vpop.f32.mrf.mxu0
        %v692 = vpop.f32.mrf.mxu0
        %v693 = vadd.f32 %v591, %v692
        %v694 = vpop.f32.mrf.mxu0
        %695 = vdwg.mxu0
        %v696 = vadd.f32 %v517, %v690
        %v697 = vadd.f32 %v520, %v693
        %v698 = vxor.u32 %v696, 2147483648
        %v699 = vxor.u32 %v697, 2147483648
        %v700 = vmul.f32 %v698, 1.442695
        %v701 = vpow.pop %v700
        %v702 = vmul.f32 %v699, 1.442695
        %v703 = vpow.pop %v702
        %v704 = vadd.f32 %v701, 1.0
        %v705 = vadd.f32 %v703, 1.0
        %v706 = vrcp.pop %v704
        %v707 = vmul.f32 1.0, %v706
        %v708 = vrcp.pop %v705
        %v709 = vmul.f32 1.0, %v708
        %712 = vrot.lane.b32.xlu0 %v690, 64
        %v713 = vpop.permute.xlu0 %712
        %714 = vrot.lane.b32.xlu0 %v693, 64
        %v715 = vpop.permute.xlu0 %714
        %v718 = vmul.f32 %v707, %v713
        %v719 = vmul.f32 %v709, %v715
        %722 = vrot.lane.b32.xlu0 %v718, 64
        %v723 = vpop.permute.xlu0 %722
        %724 = vrot.lane.b32.xlu0 %v719, 64
        %v725 = vpop.permute.xlu0 %724
        %v728 = vadd.f32 %v517, %v723
        %v729 = vadd.f32 %v520, %v725
        %v730 = vtanh.pop %v728
        %v731 = vtanh.pop %v729
        %v732 = vsub.f32 1.0, %v707
        %v733 = vsub.f32 1.0, %v709
        %736 = vrot.lane.b32.xlu0 %v730, 96
        %v737 = vpop.permute.xlu0 %736
        %738 = vrot.lane.b32.xlu0 %v731, 96
        %v739 = vpop.permute.xlu0 %738
        %v742 = vmul.f32 %v732, %v737
        %v743 = vmul.f32 %v733, %v739
        %v744 = vmul.f32 %v707, %v634
        %v745 = vmul.f32 %v709, %v635
        %v746 = vadd.f32 %v742, %v744
        %v747 = vadd.f32 %v743, %v745
        %v748 = vlaneseq
        %v749 = vshrl.u32 %v748, 7
        %v750 = vsub.s32 0, %v749
        %v751 = vrot.slane %v446, %v750
        %v752 = vadd.f32 %v582, %v751
        %v753 = vadd.f32 %v585, %v751
        %v754 = vxor.u32 %v752, 2147483648
        %v755 = vxor.u32 %v753, 2147483648
        %v756 = vmul.f32 %v754, 1.442695
        %v757 = vpow.pop %v756
        %v758 = vmul.f32 %v755, 1.442695
        %v759 = vpow.pop %v758
        %v760 = vadd.f32 %v757, 1.0
        %v761 = vadd.f32 %v759, 1.0
        %v762 = vrcp.pop %v760
        %v763 = vmul.f32 1.0, %v762
        %v764 = vrcp.pop %v761
        %v765 = vmul.f32 1.0, %v764
        %767 = vrot.lane.b32.xlu0 %v751, 64
        %v768 = vpop.permute.xlu0 %767
        %v770 = vmul.f32 %v763, %v768
        %v771 = vmul.f32 %v765, %v768
        %774 = vrot.lane.b32.xlu0 %v770, 64
        %v775 = vpop.permute.xlu0 %774
        %776 = vrot.lane.b32.xlu0 %v771, 64
        %v777 = vpop.permute.xlu0 %776
        %v780 = vadd.f32 %v582, %v775
        %v781 = vadd.f32 %v585, %v777
        %v782 = vtanh.pop %v780
        %v783 = vtanh.pop %v781
        %v784 = vsub.f32 1.0, %v763
        %v785 = vsub.f32 1.0, %v765
        %788 = vrot.lane.b32.xlu0 %v782, 96
        %v789 = vpop.permute.xlu0 %788
        %790 = vrot.lane.b32.xlu0 %v783, 96
        %v791 = vpop.permute.xlu0 %790
        %v794 = vmul.f32 %v784, %v789
        %v795 = vmul.f32 %v785, %v791
        %v796 = vpack.c.bf16 %v795, %v794
        %798 = vrot.lane.b32.xlu0 %v796, 96
        %v799 = vpop.permute.xlu0 %798
        %v804 = vunpack.c.l.b16 %v435
        %v805 = vunpack.c.l.b16 %v436
        %v806 = vunpack.c.l.b16 %v437
        %v807 = vunpack.c.l.b16 %v438
        %v808 = vpack.c.b16 %v805, %v804
        %v809 = vpack.c.b16 %v807, %v806
        %v813 = vsel %vm467, %v799, 0
        %815 = vmatprep.subr.bf16.mxu0 0
        %816 = vmatpush1.bf16.msra.mxu0 0
        %817 = vmatprep.subr.bf16.mxu0 0
        %818 = vmatpush1.bf16.msra.mxu0 0
        %819 = vmatprep.subr.bf16.mxu0 0
        %820 = vmatpush1.bf16.msra.mxu0 0
        %821 = vmatprep.subr.bf16.mxu0 0
        %822 = vmatpush1.bf16.msra.mxu0 0
        %823 = vmatprep.subr.bf16.mxu0 0
        %824 = vmatpush1.bf16.msra.mxu0 0
        %825 = vmatprep.subr.bf16.mxu0 0
        %826 = vmatpush1.bf16.msra.mxu0 0
        %827 = vmatprep.subr.bf16.mxu0 0
        %828 = vmatpush1.bf16.msra.mxu0 %v809
        %829 = vmatprep.subr.bf16.mxu0 0
        %830 = vmatpush1.bf16.msra.mxu0 %v808
        %831 = vmatprep.subr.bf16.mxu0 0
        %832 = vmatpush2.bf16.msra.mxu0 0
        %833 = vmatprep.subr.bf16.mxu0 0
        %834 = vmatpush2.bf16.msra.mxu0 0
        %835 = vmatprep.subr.bf16.mxu0 0
        %836 = vmatpush2.bf16.msra.mxu0 0
        %837 = vmatprep.subr.bf16.mxu0 0
        %838 = vmatpush2.bf16.msra.mxu0 0
        %839 = vmatprep.subr.bf16.mxu0 0
        %840 = vmatpush2.bf16.msra.mxu0 0
        %841 = vmatprep.subr.bf16.mxu0 0
        %842 = vmatpush2.bf16.msra.mxu0 0
        %843 = vmatprep.subr.bf16.mxu0 0
        %844 = vmatpush2.bf16.msra.mxu0 0
        %845 = vmatprep.subr.bf16.mxu0 0
        %846 = vmatpush2.bf16.msra.mxu0 0
        %847 = vmatprep.mubr.bf16.mxu0 0
        %848 = vmatmul.mubr.bf16.gmra.mxu0 %v813
        %v849 = vpop.f32.mrf.mxu0
        %v850 = vadd.f32 %v751, %v849
        %v851 = vpop.f32.mrf.mxu0
        %v852 = vpop.f32.mrf.mxu0
        %v853 = vadd.f32 %v751, %v852
        %v854 = vpop.f32.mrf.mxu0
        %855 = vdwg.mxu0
        %v856 = vadd.f32 %v574, %v850
        %v857 = vadd.f32 %v577, %v853
        %v858 = vxor.u32 %v856, 2147483648
        %v859 = vxor.u32 %v857, 2147483648
        %v860 = vmul.f32 %v858, 1.442695
        %v861 = vpow.pop %v860
        %v862 = vmul.f32 %v859, 1.442695
        %v863 = vpow.pop %v862
        %v864 = vadd.f32 %v861, 1.0
        %v865 = vadd.f32 %v863, 1.0
        %v866 = vrcp.pop %v864
        %v867 = vmul.f32 1.0, %v866
        %v868 = vrcp.pop %v865
        %v869 = vmul.f32 1.0, %v868
        %872 = vrot.lane.b32.xlu0 %v850, 64
        %v873 = vpop.permute.xlu0 %872
        %874 = vrot.lane.b32.xlu0 %v853, 64
        %v875 = vpop.permute.xlu0 %874
        %v878 = vmul.f32 %v867, %v873
        %v879 = vmul.f32 %v869, %v875
        %882 = vrot.lane.b32.xlu0 %v878, 64
        %v883 = vpop.permute.xlu0 %882
        %884 = vrot.lane.b32.xlu0 %v879, 64
        %v885 = vpop.permute.xlu0 %884
        %v888 = vadd.f32 %v574, %v883
        %v889 = vadd.f32 %v577, %v885
        %v890 = vtanh.pop %v888
        %v891 = vtanh.pop %v889
        %v892 = vsub.f32 1.0, %v867
        %v893 = vsub.f32 1.0, %v869
        %896 = vrot.lane.b32.xlu0 %v890, 96
        %v897 = vpop.permute.xlu0 %896
        %898 = vrot.lane.b32.xlu0 %v891, 96
        %v899 = vpop.permute.xlu0 %898
        %v902 = vmul.f32 %v892, %v897
        %v903 = vmul.f32 %v893, %v899
        %v904 = vmul.f32 %v867, %v794
        %v905 = vmul.f32 %v869, %v795
        %v906 = vadd.f32 %v902, %v904
        %v907 = vadd.f32 %v903, %v905
        %910 = vrot.lane.b32.xlu0 %v634, 96
        %v911 = vpop.permute.xlu0 %910
        %912 = vrot.lane.b32.xlu0 %v635, 96
        %v913 = vpop.permute.xlu0 %912
        %v916 = vsel %vm467, %v911, %v906
        %v917 = vsel %vm467, %v913, %v907
        %920 = vrot.lane.b32.xlu0 %v746, 96
        %v921 = vpop.permute.xlu0 %920
        %922 = vrot.lane.b32.xlu0 %v747, 96
        %v923 = vpop.permute.xlu0 %922
        %v926 = vsel %vm467, %v921, %v794
        %v927 = vsel %vm467, %v923, %v795
        %v928 = vpack.c.bf16 %v917, %v916
        %v929 = vpack.c.bf16 %v927, %v926
        %v930 = vlaneseq
        %v931 = vshrl.u32 %v930, 7
        %v932 = vsub.s32 0, %v931
        %v933 = vrot.slane %v449, %v932
        %v942 = vunpack.c.l.b16 %v423
        %v943 = vunpack.c.l.b16 %v424
        %v944 = vunpack.c.l.b16 %v425
        %v945 = vunpack.c.l.b16 %v426
        %v946 = vunpack.c.l.b16 %v427
        %v947 = vunpack.c.l.b16 %v428
        %v948 = vunpack.c.l.b16 %v429
        %v949 = vunpack.c.l.b16 %v430
        %v950 = vpack.c.b16 %v943, %v942
        %v951 = vpack.c.b16 %v945, %v944
        %v952 = vpack.c.b16 %v947, %v946
        %v953 = vpack.c.b16 %v949, %v948
        %vm958 = vcmask 523264
        %v960 = vsel %vm958, %v928, 0
        %v963 = vsel %vm958, %v929, 0
        %965 = vmatprep.subr.bf16.mxu0 0
        %966 = vmatpush1.bf16.msra.mxu0 0
        %967 = vmatprep.subr.bf16.mxu0 0
        %968 = vmatpush1.bf16.msra.mxu0 0
        %969 = vmatprep.subr.bf16.mxu0 0
        %970 = vmatpush1.bf16.msra.mxu0 0
        %971 = vmatprep.subr.bf16.mxu0 0
        %972 = vmatpush1.bf16.msra.mxu0 0
        %973 = vmatprep.subr.bf16.mxu0 0
        %974 = vmatpush1.bf16.msra.mxu0 %v953
        %975 = vmatprep.subr.bf16.mxu0 0
        %976 = vmatpush1.bf16.msra.mxu0 %v952
        %977 = vmatprep.subr.bf16.mxu0 0
        %978 = vmatpush1.bf16.msra.mxu0 %v951
        %979 = vmatprep.subr.bf16.mxu0 0
        %980 = vmatpush1.bf16.msra.mxu0 %v950
        %981 = vmatprep.subr.bf16.mxu0 0
        %982 = vmatpush2.bf16.msra.mxu0 0
        %983 = vmatprep.subr.bf16.mxu0 0
        %984 = vmatpush2.bf16.msra.mxu0 0
        %985 = vmatprep.subr.bf16.mxu0 0
        %986 = vmatpush2.bf16.msra.mxu0 0
        %987 = vmatprep.subr.bf16.mxu0 0
        %988 = vmatpush2.bf16.msra.mxu0 0
        %989 = vmatprep.subr.bf16.mxu0 0
        %990 = vmatpush2.bf16.msra.mxu0 0
        %991 = vmatprep.subr.bf16.mxu0 0
        %992 = vmatpush2.bf16.msra.mxu0 0
        %993 = vmatprep.subr.bf16.mxu0 0
        %994 = vmatpush2.bf16.msra.mxu0 0
        %995 = vmatprep.subr.bf16.mxu0 0
        %996 = vmatpush2.bf16.msra.mxu0 0
        %997 = vmatprep.mubr.bf16.mxu0 0
        %998 = vmatmul.mubr.bf16.gmra.mxu0 %v960
        %v999 = vpop.f32.mrf.mxu0
        %v1000 = vadd.f32 %v933, %v999
        %v1001 = vpop.f32.mrf.mxu0
        %v1002 = vpop.f32.mrf.mxu0
        %v1003 = vadd.f32 %v933, %v1002
        %v1004 = vpop.f32.mrf.mxu0
        %1005 = vmatprep.mubr.bf16.mxu0 0
        %1006 = vmatmul.mubr.bf16.gmra.mxu0 %v963
        %v1007 = vpop.f32.mrf.mxu0
        %v1008 = vadd.f32 %v933, %v1007
        %v1009 = vpop.f32.mrf.mxu0
        %v1010 = vpop.f32.mrf.mxu0
        %v1011 = vadd.f32 %v933, %v1010
        %v1012 = vpop.f32.mrf.mxu0
        %1013 = vdwg.mxu0
        %v1014 = vlaneseq
        %v1015 = vshrl.u32 %v1014, 7
        %v1016 = vsub.s32 0, %v1015
        %v1017 = vrot.slane %v447, %v1016
        %v1026 = vunpack.c.l.b16 %v415
        %v1027 = vunpack.c.l.b16 %v416
        %v1028 = vunpack.c.l.b16 %v417
        %v1029 = vunpack.c.l.b16 %v418
        %v1030 = vunpack.c.l.b16 %v419
        %v1031 = vunpack.c.l.b16 %v420
        %v1032 = vunpack.c.l.b16 %v421
        %v1033 = vunpack.c.l.b16 %v422
        %v1034 = vpack.c.b16 %v1027, %v1026
        %v1035 = vpack.c.b16 %v1029, %v1028
        %v1036 = vpack.c.b16 %v1031, %v1030
        %v1037 = vpack.c.b16 %v1033, %v1032
        %1042 = vmatprep.subr.bf16.mxu0 0
        %1043 = vmatpush1.bf16.msra.mxu0 0
        %1044 = vmatprep.subr.bf16.mxu0 0
        %1045 = vmatpush1.bf16.msra.mxu0 0
        %1046 = vmatprep.subr.bf16.mxu0 0
        %1047 = vmatpush1.bf16.msra.mxu0 0
        %1048 = vmatprep.subr.bf16.mxu0 0
        %1049 = vmatpush1.bf16.msra.mxu0 0
        %1050 = vmatprep.subr.bf16.mxu0 0
        %1051 = vmatpush1.bf16.msra.mxu0 %v1037
        %1052 = vmatprep.subr.bf16.mxu0 0
        %1053 = vmatpush1.bf16.msra.mxu0 %v1036
        %1054 = vmatprep.subr.bf16.mxu0 0
        %1055 = vmatpush1.bf16.msra.mxu0 %v1035
        %1056 = vmatprep.subr.bf16.mxu0 0
        %1057 = vmatpush1.bf16.msra.mxu0 %v1034
        %1058 = vmatprep.subr.bf16.mxu0 0
        %1059 = vmatpush2.bf16.msra.mxu0 0
        %1060 = vmatprep.subr.bf16.mxu0 0
        %1061 = vmatpush2.bf16.msra.mxu0 0
        %1062 = vmatprep.subr.bf16.mxu0 0
        %1063 = vmatpush2.bf16.msra.mxu0 0
        %1064 = vmatprep.subr.bf16.mxu0 0
        %1065 = vmatpush2.bf16.msra.mxu0 0
        %1066 = vmatprep.subr.bf16.mxu0 0
        %1067 = vmatpush2.bf16.msra.mxu0 0
        %1068 = vmatprep.subr.bf16.mxu0 0
        %1069 = vmatpush2.bf16.msra.mxu0 0
        %1070 = vmatprep.subr.bf16.mxu0 0
        %1071 = vmatpush2.bf16.msra.mxu0 0
        %1072 = vmatprep.subr.bf16.mxu0 0
        %1073 = vmatpush2.bf16.msra.mxu0 0
        %1074 = vmatprep.mubr.bf16.mxu0 0
        %1075 = vmatmul.mubr.bf16.gmra.mxu0 %v960
        %v1076 = vpop.f32.mrf.mxu0
        %v1077 = vadd.f32 %v1017, %v1076
        %v1078 = vpop.f32.mrf.mxu0
        %v1079 = vpop.f32.mrf.mxu0
        %v1080 = vadd.f32 %v1017, %v1079
        %v1081 = vpop.f32.mrf.mxu0
        %1082 = vdwg.mxu0
        %v1083 = vlaneseq
        %v1084 = vshrl.u32 %v1083, 7
        %v1085 = vsub.s32 0, %v1084
        %v1086 = vrot.slane %v448, %v1085
        %v1087 = vadd.f32 %v1077, %v1086
        %v1088 = vadd.f32 %v1080, %v1086
        %v1089 = vxor.u32 %v1087, 2147483648
        %v1090 = vxor.u32 %v1088, 2147483648
        %v1091 = vmul.f32 %v1089, 1.442695
        %v1092 = vpow.pop %v1091
        %v1093 = vmul.f32 %v1090, 1.442695
        %v1094 = vpow.pop %v1093
        %v1095 = vadd.f32 %v1092, 1.0
        %v1096 = vadd.f32 %v1094, 1.0
        %v1097 = vrcp.pop %v1095
        %v1098 = vmul.f32 1.0, %v1097
        %v1099 = vrcp.pop %v1096
        %v1100 = vmul.f32 1.0, %v1099
        %1102 = vrot.lane.b32.xlu0 %v1086, 64
        %v1103 = vpop.permute.xlu0 %1102
        %v1105 = vmul.f32 %v1098, %v1103
        %v1106 = vmul.f32 %v1100, %v1103
        %1109 = vrot.lane.b32.xlu0 %v1105, 64
        %v1110 = vpop.permute.xlu0 %1109
        %1111 = vrot.lane.b32.xlu0 %v1106, 64
        %v1112 = vpop.permute.xlu0 %1111
        %v1115 = vadd.f32 %v1077, %v1110
        %v1116 = vadd.f32 %v1080, %v1112
        %v1117 = vtanh.pop %v1115
        %v1118 = vtanh.pop %v1116
        %v1119 = vsub.f32 1.0, %v1098
        %v1120 = vsub.f32 1.0, %v1100
        %1123 = vrot.lane.b32.xlu0 %v1117, 96
        %v1124 = vpop.permute.xlu0 %1123
        %1125 = vrot.lane.b32.xlu0 %v1118, 96
        %v1126 = vpop.permute.xlu0 %1125
        %v1129 = vmul.f32 %v1119, %v1124
        %v1130 = vmul.f32 %v1120, %v1126
        %v1131 = vlaneseq
        %v1132 = vshrl.u32 %v1131, 7
        %v1133 = vsub.s32 0, %v1132
        %v1134 = vrot.slane %v450, %v1133
        %v1135 = vadd.f32 %v1008, %v1134
        %v1136 = vadd.f32 %v1011, %v1134
        %v1137 = vxor.u32 %v1135, 2147483648
        %v1138 = vxor.u32 %v1136, 2147483648
        %v1139 = vmul.f32 %v1137, 1.442695
        %v1140 = vpow.pop %v1139
        %v1141 = vmul.f32 %v1138, 1.442695
        %v1142 = vpow.pop %v1141
        %v1143 = vadd.f32 %v1140, 1.0
        %v1144 = vadd.f32 %v1142, 1.0
        %v1145 = vrcp.pop %v1143
        %v1146 = vmul.f32 1.0, %v1145
        %v1147 = vrcp.pop %v1144
        %v1148 = vmul.f32 1.0, %v1147
        %1150 = vrot.lane.b32.xlu0 %v1134, 64
        %v1151 = vpop.permute.xlu0 %1150
        %v1153 = vmul.f32 %v1146, %v1151
        %v1154 = vmul.f32 %v1148, %v1151
        %1157 = vrot.lane.b32.xlu0 %v1153, 64
        %v1158 = vpop.permute.xlu0 %1157
        %1159 = vrot.lane.b32.xlu0 %v1154, 64
        %v1160 = vpop.permute.xlu0 %1159
        %v1163 = vadd.f32 %v1008, %v1158
        %v1164 = vadd.f32 %v1011, %v1160
        %v1165 = vtanh.pop %v1163
        %v1166 = vtanh.pop %v1164
        %v1167 = vsub.f32 1.0, %v1146
        %v1168 = vsub.f32 1.0, %v1148
        %1171 = vrot.lane.b32.xlu0 %v1165, 96
        %v1172 = vpop.permute.xlu0 %1171
        %1173 = vrot.lane.b32.xlu0 %v1166, 96
        %v1174 = vpop.permute.xlu0 %1173
        %v1177 = vmul.f32 %v1167, %v1172
        %v1178 = vmul.f32 %v1168, %v1174
        %v1179 = vpack.c.bf16 %v1178, %v1177
        %1181 = vrot.lane.b32.xlu0 %v1179, 96
        %v1182 = vpop.permute.xlu0 %1181
        %v1187 = vunpack.c.l.b16 %v439
        %v1188 = vunpack.c.l.b16 %v440
        %v1189 = vunpack.c.l.b16 %v441
        %v1190 = vunpack.c.l.b16 %v442
        %v1191 = vpack.c.b16 %v1188, %v1187
        %v1192 = vpack.c.b16 %v1190, %v1189
        %v1196 = vsel %vm467, %v1182, 0
        %1198 = vmatprep.subr.bf16.mxu0 0
        %1199 = vmatpush1.bf16.msra.mxu0 0
        %1200 = vmatprep.subr.bf16.mxu0 0
        %1201 = vmatpush1.bf16.msra.mxu0 0
        %1202 = vmatprep.subr.bf16.mxu0 0
        %1203 = vmatpush1.bf16.msra.mxu0 0
        %1204 = vmatprep.subr.bf16.mxu0 0
        %1205 = vmatpush1.bf16.msra.mxu0 0
        %1206 = vmatprep.subr.bf16.mxu0 0
        %1207 = vmatpush1.bf16.msra.mxu0 0
        %1208 = vmatprep.subr.bf16.mxu0 0
        %1209 = vmatpush1.bf16.msra.mxu0 0
        %1210 = vmatprep.subr.bf16.mxu0 0
        %1211 = vmatpush1.bf16.msra.mxu0 %v1192
        %1212 = vmatprep.subr.bf16.mxu0 0
        %1213 = vmatpush1.bf16.msra.mxu0 %v1191
        %1214 = vmatprep.subr.bf16.mxu0 0
        %1215 = vmatpush2.bf16.msra.mxu0 0
        %1216 = vmatprep.subr.bf16.mxu0 0
        %1217 = vmatpush2.bf16.msra.mxu0 0
        %1218 = vmatprep.subr.bf16.mxu0 0
        %1219 = vmatpush2.bf16.msra.mxu0 0
        %1220 = vmatprep.subr.bf16.mxu0 0
        %1221 = vmatpush2.bf16.msra.mxu0 0
        %1222 = vmatprep.subr.bf16.mxu0 0
        %1223 = vmatpush2.bf16.msra.mxu0 0
        %1224 = vmatprep.subr.bf16.mxu0 0
        %1225 = vmatpush2.bf16.msra.mxu0 0
        %1226 = vmatprep.subr.bf16.mxu0 0
        %1227 = vmatpush2.bf16.msra.mxu0 0
        %1228 = vmatprep.subr.bf16.mxu0 0
        %1229 = vmatpush2.bf16.msra.mxu0 0
        %1230 = vmatprep.mubr.bf16.mxu0 0
        %1231 = vmatmul.mubr.bf16.gmra.mxu0 %v1196
        %v1232 = vpop.f32.mrf.mxu0
        %v1233 = vadd.f32 %v1134, %v1232
        %v1234 = vpop.f32.mrf.mxu0
        %v1235 = vpop.f32.mrf.mxu0
        %v1236 = vadd.f32 %v1134, %v1235
        %v1237 = vpop.f32.mrf.mxu0
        %1238 = vdwg.mxu0
        %v1239 = vadd.f32 %v1000, %v1233
        %v1240 = vadd.f32 %v1003, %v1236
        %v1241 = vxor.u32 %v1239, 2147483648
        %v1242 = vxor.u32 %v1240, 2147483648
        %v1243 = vmul.f32 %v1241, 1.442695
        %v1244 = vpow.pop %v1243
        %v1245 = vmul.f32 %v1242, 1.442695
        %v1246 = vpow.pop %v1245
        %v1247 = vadd.f32 %v1244, 1.0
        %v1248 = vadd.f32 %v1246, 1.0
        %v1249 = vrcp.pop %v1247
        %v1250 = vmul.f32 1.0, %v1249
        %v1251 = vrcp.pop %v1248
        %v1252 = vmul.f32 1.0, %v1251
        %1255 = vrot.lane.b32.xlu0 %v1233, 64
        %v1256 = vpop.permute.xlu0 %1255
        %1257 = vrot.lane.b32.xlu0 %v1236, 64
        %v1258 = vpop.permute.xlu0 %1257
        %v1261 = vmul.f32 %v1250, %v1256
        %v1262 = vmul.f32 %v1252, %v1258
        %1265 = vrot.lane.b32.xlu0 %v1261, 64
        %v1266 = vpop.permute.xlu0 %1265
        %1267 = vrot.lane.b32.xlu0 %v1262, 64
        %v1268 = vpop.permute.xlu0 %1267
        %v1271 = vadd.f32 %v1000, %v1266
        %v1272 = vadd.f32 %v1003, %v1268
        %v1273 = vtanh.pop %v1271
        %v1274 = vtanh.pop %v1272
        %v1275 = vsub.f32 1.0, %v1250
        %v1276 = vsub.f32 1.0, %v1252
        %1279 = vrot.lane.b32.xlu0 %v1273, 96
        %v1280 = vpop.permute.xlu0 %1279
        %1281 = vrot.lane.b32.xlu0 %v1274, 96
        %v1282 = vpop.permute.xlu0 %1281
        %v1285 = vmul.f32 %v1275, %v1280
        %v1286 = vmul.f32 %v1276, %v1282
        %v1287 = vmul.f32 %v1250, %v1177
        %v1288 = vmul.f32 %v1252, %v1178
        %v1289 = vadd.f32 %v1285, %v1287
        %v1290 = vadd.f32 %v1286, %v1288
        %v1291 = vld [vmem:[%s8] sm:$0x1]
        %v1292 = vld [vmem:[%s8 + $0x1] sm:$0x1]
        %v1293 = vlaneseq
        %v1294 = vshrl.u32 %v1293, 7
        %v1295 = vsub.s32 0, %v1294
        %v1296 = vrot.slane %v1291, %v1295
        %1298 = vrot.lane.b32.xlu0 %v1296, 32
        %v1299 = vpop.permute.xlu0 %1298
        %v1301 = vmul.f32 %v1129, %v1299
        %v1302 = vmul.f32 %v1130, %v1299
        %1305 = vrot.lane.b32.xlu0 %v1301, 96
        %v1306 = vpop.permute.xlu0 %1305
        %1307 = vrot.lane.b32.xlu0 %v1302, 96
        %v1308 = vpop.permute.xlu0 %1307
        %v1311 = vsel %vm467, %v1306, 0.0
        %1312 = vadd.xlane.f32.xlu0 %v1311
        %v1313 = vpop.xlane.xlu0 %1312
        %v1314 = vsel %vm467, %v1308, 0.0
        %1315 = vadd.xlane.f32.xlu0 %v1314
        %v1316 = vpop.xlane.xlu0 %1315
        %v1317 = vlaneseq
        %v1318 = vshrl.u32 %v1317, 7
        %v1319 = vsub.s32 0, %v1318
        %v1320 = vrot.slane %v1292, %v1319
        %1322 = vrot.lane.b32.xlu0 %v1320, 32
        %v1323 = vpop.permute.xlu0 %1322
        %v1325 = vmul.f32 %v1289, %v1323
        %v1326 = vmul.f32 %v1290, %v1323
        %1329 = vrot.lane.b32.xlu0 %v1325, 96
        %v1330 = vpop.permute.xlu0 %1329
        %1331 = vrot.lane.b32.xlu0 %v1326, 96
        %v1332 = vpop.permute.xlu0 %1331
        %v1335 = vsel %vm467, %v1330, 0.0
        %1336 = vadd.xlane.f32.xlu0 %v1335
        %v1337 = vpop.xlane.xlu0 %1336
        %v1338 = vsel %vm467, %v1332, 0.0
        %1339 = vadd.xlane.f32.xlu0 %v1338
        %v1340 = vpop.xlane.xlu0 %1339
        %v1341 = vadd.f32 %v1313, %v1337
        %v1342 = vadd.f32 %v1316, %v1340
        %v1343 = vld [vmem:[#allocation2] sm:$0x1]
        %v1345 = vlaneseq
        %v1346 = vshrl.u32 %v1345, 7
        %v1347 = vsub.s32 0, %v1346
        %v1348 = vrot.slane %v1343, %v1347
        %v1350 = vadd.f32 %v1341, %v1348
        %v1351 = vadd.f32 %v1342, %v1348
        %v1352 = vmul.f32 %v1350, 0.5
        %v1353 = vmul.f32 %v1351, 0.5
        %v1354 = vmul.f32 %v1350, 0.044715
        %v1355 = vmul.f32 %v1351, 0.044715
        %v1356 = vmul.f32 %v1354, %v1350
        %v1357 = vmul.f32 %v1355, %v1351
        %v1358 = vmul.f32 %v1356, %v1350
        %v1359 = vmul.f32 %v1357, %v1351
        %v1360 = vadd.f32 %v1350, %v1358
        %v1361 = vadd.f32 %v1351, %v1359
        %v1362 = vmul.f32 %v1360, 0.7978846
        %v1363 = vmul.f32 %v1361, 0.7978846
        %v1364 = vtanh.pop %v1362
        %v1365 = vtanh.pop %v1363
        %v1366 = vadd.f32 %v1364, 1.0
        %v1367 = vadd.f32 %v1365, 1.0
        %v1368 = vmul.f32 %v1352, %v1366
        %v1369 = vmul.f32 %v1353, %v1367
        %v1370 = vld [vmem:[%s3] sm:$0xff]
        %v1371 = vld [vmem:[%s3 + $0x8] sm:$0xff]
        %vm1372 = vcmp.gt.f32.partialorder %v1370, 0.0
        %vm1373 = vcmp.gt.f32.partialorder %v1371, 0.0
        %1375 = vset.pattern.permute.xlu0 0
        %1376 = vperm.xlu0 %1375, %v1368
        %v1377 = vpop.permute.xlu0 %1376
        %1380 = vset.pattern.permute.xlu0 0
        %1381 = vperm.xlu0 %1380, %v1369
        %v1382 = vpop.permute.xlu0 %1381
        %v1384 = vsel %vm1372, %v1377, -inf
        %v1385 = vsel %vm1373, %v1382, -inf
        %vm1386 = vcmask 64512
        %v1387 = vsel %vm1386, %v1384, -inf
        %v1388 = vsel %vm1386, %v1385, -inf
        %v1389 = vmax.f32 %v1387, %v1388
        %v1390 = vrot.slane %v1389, 4
        %v1391 = vmax.f32 %v1389, %v1390
        %v1392 = vrot.slane %v1391, 2
        %v1393 = vmax.f32 %v1391, %v1392
        %v1394 = vrot.slane %v1393, 1
        %v1395 = vmax.f32 %v1393, %v1394
        %v1396 = vsel %vm1372, %v1395, 0.0
        %v1397 = vsel %vm1373, %v1395, 0.0
        %v1398 = vsel %vm1386, %v1396, 0.0
        %1399 = vadd.xlane.f32.xlu0 %v1398
        %v1400 = vpop.xlane.xlu0 %1399
        %v1401 = vsel %vm1386, %v1397, 0.0
        %1402 = vadd.xlane.f32.xlu0 %v1401
        %v1403 = vpop.xlane.xlu0 %1402
        %v1404 = vsub.f32 %v1368, %v1400
        %v1405 = vsub.f32 %v1369, %v1403
        %v1406 = vmul.f32 %v1404, 1.442695
        %v1407 = vpow.pop %v1406
        %v1408 = vmul.f32 %v1405, 1.442695
        %v1409 = vpow.pop %v1408
        %1411 = vset.pattern.permute.xlu0 0
        %1412 = vperm.xlu0 %1411, %v1407
        %v1413 = vpop.permute.xlu0 %1412
        %1416 = vset.pattern.permute.xlu0 0
        %1417 = vperm.xlu0 %1416, %v1409
        %v1418 = vpop.permute.xlu0 %1417
        %v1420 = vmul.f32 %v1370, %v1413
        %v1421 = vmul.f32 %v1371, %v1418
        %v1422 = vsel %vm1386, %v1420, 0.0
        %v1423 = vsel %vm1386, %v1421, 0.0
        %v1424 = vadd.f32 %v1422, %v1423
        %v1425 = vrot.slane %v1424, 4
        %v1426 = vadd.f32 %v1424, %v1425
        %v1427 = vrot.slane %v1426, 2
        %v1428 = vadd.f32 %v1426, %v1427
        %v1429 = vrot.slane %v1428, 1
        %v1430 = vadd.f32 %v1428, %v1429
        %v1431 = vsel %vm1372, %v1430, 0.0
        %v1432 = vsel %vm1373, %v1430, 0.0
        %v1433 = vsel %vm1386, %v1431, 0.0
        %1434 = vadd.xlane.f32.xlu0 %v1433
        %v1435 = vpop.xlane.xlu0 %1434
        %v1436 = vsel %vm1386, %v1432, 0.0
        %1437 = vadd.xlane.f32.xlu0 %v1436
        %v1438 = vpop.xlane.xlu0 %1437
        %v1439 = vrcp.pop %v1435
        %v1440 = vmul.f32 %v1407, %v1439
        %v1441 = vrcp.pop %v1438
        %v1442 = vmul.f32 %v1409, %v1441
        %v1443 = vld [vmem:[%s399] sm:$0xff]
        %v1444 = vld [vmem:[%s399 + $0x8] sm:$0xff]
        %v1445 = vadd.f32 %v1368, %v1443
        %v1446 = vadd.f32 %v1369, %v1444
        %v1447 = vmul.f32 %v1445, 10.0
        %v1448 = vmul.f32 %v1446, 10.0
        %1450 = vset.pattern.permute.xlu0 0
        %1451 = vperm.xlu0 %1450, %v1447
        %v1452 = vpop.permute.xlu0 %1451
        %1455 = vset.pattern.permute.xlu0 0
        %1456 = vperm.xlu0 %1455, %v1448
        %v1457 = vpop.permute.xlu0 %1456
        %v1459 = vsel %vm1372, %v1452, -inf
        %v1460 = vsel %vm1373, %v1457, -inf
        %v1461 = vsel %vm1386, %v1459, -inf
        %v1462 = vsel %vm1386, %v1460, -inf
        %v1463 = vmax.f32 %v1461, %v1462
        %v1464 = vrot.slane %v1463, 4
        %v1465 = vmax.f32 %v1463, %v1464
        %v1466 = vrot.slane %v1465, 2
        %v1467 = vmax.f32 %v1465, %v1466
        %v1468 = vrot.slane %v1467, 1
        %v1469 = vmax.f32 %v1467, %v1468
        %v1470 = vsel %vm1372, %v1469, 0.0
        %v1471 = vsel %vm1373, %v1469, 0.0
        %v1472 = vsel %vm1386, %v1470, 0.0
        %1473 = vadd.xlane.f32.xlu0 %v1472
        %v1474 = vpop.xlane.xlu0 %1473
        %v1475 = vsel %vm1386, %v1471, 0.0
        %1476 = vadd.xlane.f32.xlu0 %v1475
        %v1477 = vpop.xlane.xlu0 %1476
        %v1478 = vsub.f32 %v1447, %v1474
        %v1479 = vsub.f32 %v1448, %v1477
        %v1480 = vmul.f32 %v1478, 1.442695
        %v1481 = vpow.pop %v1480
        %v1482 = vmul.f32 %v1479, 1.442695
        %v1483 = vpow.pop %v1482
        %1485 = vset.pattern.permute.xlu0 0
        %1486 = vperm.xlu0 %1485, %v1481
        %v1487 = vpop.permute.xlu0 %1486
        %1490 = vset.pattern.permute.xlu0 0
        %1491 = vperm.xlu0 %1490, %v1483
        %v1492 = vpop.permute.xlu0 %1491
        %v1494 = vmul.f32 %v1370, %v1487
        %v1495 = vmul.f32 %v1371, %v1492
        %v1496 = vsel %vm1386, %v1494, 0.0
        %v1497 = vsel %vm1386, %v1495, 0.0
        %v1498 = vadd.f32 %v1496, %v1497
        %v1499 = vrot.slane %v1498, 4
        %v1500 = vadd.f32 %v1498, %v1499
        %v1501 = vrot.slane %v1500, 2
        %v1502 = vadd.f32 %v1500, %v1501
        %v1503 = vrot.slane %v1502, 1
        %v1504 = vadd.f32 %v1502, %v1503
        %v1505 = vsel %vm1372, %v1504, 0.0
        %v1506 = vsel %vm1373, %v1504, 0.0
        %v1507 = vsel %vm1386, %v1505, 0.0
        %1508 = vadd.xlane.f32.xlu0 %v1507
        %v1509 = vpop.xlane.xlu0 %1508
        %v1510 = vsel %vm1386, %v1506, 0.0
        %1511 = vadd.xlane.f32.xlu0 %v1510
        %v1512 = vpop.xlane.xlu0 %1511
        %v1513 = vrcp.pop %v1509
        %v1514 = vmul.f32 %v1481, %v1513
        %v1515 = vrcp.pop %v1512
        %v1516 = vmul.f32 %v1483, %v1515
        %v1517 = vmul.f32 %v1440, %v1514
        %v1518 = vmul.f32 %v1442, %v1516
        %1520 = vset.pattern.permute.xlu0 0
        %1521 = vperm.xlu0 %1520, %v1517
        %v1522 = vpop.permute.xlu0 %1521
        %1525 = vset.pattern.permute.xlu0 0
        %1526 = vperm.xlu0 %1525, %v1518
        %v1527 = vpop.permute.xlu0 %1526
        %v1529 = vmul.f32 %v401, %v1522
        %v1530 = vmul.f32 %v402, %v1527
        %v1531 = vld [vmem:[%s4] sm:$0xff]
        %vm1532 = vcmask 130048
        %v1534 = vsel %vm1532, %v1531, 0
        %1536 = vmatprep.subr.mxu0 0.0
        %1537 = vmatpush1.msra.mxu0 0.0
        %1538 = vmatprep.subr.mxu0 0.0
        %1539 = vmatpush1.msra.mxu0 0.0
        %1540 = vmatprep.subr.mxu0 0.0
        %1541 = vmatpush1.msra.mxu0 0.0
        %1542 = vmatprep.subr.mxu0 0.0
        %1543 = vmatpush1.msra.mxu0 0.0
        %1544 = vmatprep.subr.mxu0 0.0
        %1545 = vmatpush1.msra.mxu0 0.0
        %1546 = vmatprep.subr.mxu0 0.0
        %1547 = vmatpush1.msra.mxu0 0.0
        %1548 = vmatprep.subr.mxu0 0.0
        %1549 = vmatpush1.msra.mxu0 0.0
        %1550 = vmatprep.subr.mxu0 0.0
        %1551 = vmatpush1.msra.mxu0 0.0
        %1552 = vmatprep.subr.mxu0 0.0
        %1553 = vmatpush1.msra.mxu0 0.0
        %1554 = vmatprep.subr.mxu0 0.0
        %1555 = vmatpush1.msra.mxu0 0.0
        %1556 = vmatprep.subr.mxu0 0.0
        %1557 = vmatpush1.msra.mxu0 0.0
        %1558 = vmatprep.subr.mxu0 0.0
        %1559 = vmatpush1.msra.mxu0 0.0
        %1560 = vmatprep.subr.mxu0 0.0
        %1561 = vmatpush1.msra.mxu0 0.0
        %1562 = vmatprep.subr.mxu0 0.0
        %1563 = vmatpush1.msra.mxu0 0.0
        %1564 = vmatprep.subr.mxu0 0.0
        %1565 = vmatpush1.msra.mxu0 %v1530
        %1566 = vmatprep.subr.mxu0 0.0
        %1567 = vmatpush1.msra.mxu0 %v1529
        %1568 = vmatprep.subr.mxu0 0.0
        %1569 = vmatpush2.msra.mxu0 0.0
        %1570 = vmatprep.subr.mxu0 0.0
        %1571 = vmatpush2.msra.mxu0 0.0
        %1572 = vmatprep.subr.mxu0 0.0
        %1573 = vmatpush2.msra.mxu0 0.0
        %1574 = vmatprep.subr.mxu0 0.0
        %1575 = vmatpush2.msra.mxu0 0.0
        %1576 = vmatprep.subr.mxu0 0.0
        %1577 = vmatpush2.msra.mxu0 0.0
        %1578 = vmatprep.subr.mxu0 0.0
        %1579 = vmatpush2.msra.mxu0 0.0
        %1580 = vmatprep.subr.mxu0 0.0
        %1581 = vmatpush2.msra.mxu0 0.0
        %1582 = vmatprep.subr.mxu0 0.0
        %1583 = vmatpush2.msra.mxu0 0.0
        %1584 = vmatprep.subr.mxu0 0.0
        %1585 = vmatpush2.msra.mxu0 0.0
        %1586 = vmatprep.subr.mxu0 0.0
        %1587 = vmatpush2.msra.mxu0 0.0
        %1588 = vmatprep.subr.mxu0 0.0
        %1589 = vmatpush2.msra.mxu0 0.0
        %1590 = vmatprep.subr.mxu0 0.0
        %1591 = vmatpush2.msra.mxu0 0.0
        %1592 = vmatprep.subr.mxu0 0.0
        %1593 = vmatpush2.msra.mxu0 0.0
        %1594 = vmatprep.subr.mxu0 0.0
        %1595 = vmatpush2.msra.mxu0 0.0
        %1596 = vmatprep.subr.mxu0 0.0
        %1597 = vmatpush2.msra.mxu0 0.0
        %1598 = vmatprep.subr.mxu0 0.0
        %1599 = vmatpush2.msra.mxu0 0.0
        %1600 = vmatprep.mubr.f32.mxu0 0.0
        %1601 = vmatmul.mubr.f32.gmra.mxu0 %v1534
        %v1602 = vpop.f32.mrf.mxu0
        %v1603 = vadd.f32 0.0, %v1602
        %v1604 = vpop.f32.mrf.mxu0
        %1605 = vdwg.mxu0
        %1606 = vst.msk [vmem:[%s384] sm:$0xff] %vm467, %v1603
        %s1607 = sand.u32 %s259, 1
        %s1608 = scalar_lea.sflag [#allocation4], %s1607
        %s1609 = sand.u32 %s259, 1
        %s1610 = smul.addr %s1609, 8
        %s1611 = scalar_lea.vmem [#allocation3], %s1610
        // Predicated region
        $region61: #{two_stage_attention.1} parent=59 // pred_check
          %p1612 = pneg %p269
        $region62: #{two_stage_attention.1} parent=59 // pred_check_branch
          %1614 = sbr.rel (%p1612) target = $region64
        $region63: #{two_stage_attention.1} parent=59 // pred_region
          %s1616 = ssub.s32 128, 128
          %1617 = vsyncadd %s1608, %s1616
          %s1618 = smul.addr %s26, 128
          %s1619 = scalar_lea.hbm %s10, %s1618
          %s1621 = sshll.u32 %s1611, 4
          %s1622 = int_to_ptr.vmem [resolvable:$true] %s1621
          %1624 = dma.vmem_to_hbm [thread:$0]  %s1622, 128, %s1619, %s1608
        $region64: #{two_stage_attention.1} parent=59 // pred_fallthru
          _
      $region60: #{two_stage_attention.1} parent=5 // pred_fallthru
        _
      %p1625 = scmp.le.s32.totalorder 2, %s21
      // Predicated region
      $region65: #{two_stage_attention.1} parent=5 // pred_check
        %p1626 = pneg %p1625
      $region66: #{two_stage_attention.1} parent=5 // pred_check_branch
        %1628 = sbr.rel (%p1626) target = $region68
      $region67: #{two_stage_attention.1} parent=5 // pred_region
        %s1629 = ssub.s32 %s21, 2
        // Predicated region
        $region69: #{two_stage_attention.1} parent=67 // pred_check
          %p1630 = pneg %p275
        $region70: #{two_stage_attention.1} parent=67 // pred_check_branch
          %1632 = sbr.rel (%p1630) target = $region72
        $region71: #{two_stage_attention.1} parent=67 // pred_region
          %s1633 = sand.u32 %s260, 1
          %s1634 = scalar_lea.sflag [#allocation4], %s1633
          %s1635 = sand.u32 %s260, 1
          %s1636 = smul.addr %s1635, 8
          %s1637 = scalar_lea.vmem [#allocation3], %s1636
          %1638 = dma.done %s1634, 128
        $region72: #{two_stage_attention.1} parent=67 // pred_fallthru
          _
      $region68: #{two_stage_attention.1} parent=5 // pred_fallthru
        _
    $region6: #{two_stage_attention.1} parent=1 // loop_footer
      %s25 = sadd.s32 1, %s21
    $region7: #{two_stage_attention.1} parent=1 // loop_footer_branch
      %20 = sbr.rel target = $region3
    $region8: #{two_stage_attention.1} parent=1 // loop_exit
      _
    %1639 = vsyncpa [#allocation4], 1
    %s1640 = scalar_lea.sflag [#allocation4], 1
    %1641 = vsyncpa %s1640, 1

</llo_original>
